<compile_context>
chip_gen: v7x
topology: tpu7x:2x2x1
jax: 0.10.0
libtpu: 0.0.40
codegen_flags: <defaults>
</compile_context>

<pallas_src>
import jax
import jax.numpy as jnp
from jax.experimental import pallas as pl
from jax.experimental.pallas import tpu as pltpu


def _round_up(n, m):
    return ((n + m - 1) // m) * m


def critic_kernel(x_ref, w1_ref, b1_ref, w2_ref, b2_ref, w3_ref, b3_ref, o_ref):
    f32 = jnp.float32
    cdt = w1_ref.dtype   # MXU input dtype (f32 or bf16)
    adt = b1_ref.dtype   # activation / bias dtype (bf16 on v6e/v7x, f32 on v5e)

    # Cast x in-kernel (VPU slack slots) instead of an extra XLA pass over HBM.
    x = x_ref[...].astype(cdt)                                     # (TB, obs)

    # Layer 1: MXU matmul, f32 accumulation; bias + ReLU on the VPU in adt.
    h1 = jnp.dot(x, w1_ref[...], preferred_element_type=f32)       # (TB, H) f32
    h1 = jnp.maximum(h1.astype(adt) + b1_ref[...], 0.0).astype(cdt)

    # Layer 2.
    h2 = jnp.dot(h1, w2_ref[...], preferred_element_type=f32)      # (TB, H) f32
    h2 = jnp.maximum(h2.astype(adt) + b2_ref[...], 0.0)

    # Layer 3 has a single output column: a 1-column matmul would waste the
    # MXU output lanes, so do broadcast-multiply + lane reduction in f32.
    out = jnp.sum(h2.astype(f32) * w3_ref[...], axis=-1) + b3_ref[0, 0]   # (TB,)
    # TODO(synk): check the bundle dump that the sublane-major reduction result
    # is relaid out to the lane-dense o_ref[0, :] via XLU shuffles rather than
    # a VMEM round-trip; if the latter, reduce into a (TB//128, 128) tile.
    o_ref[0, :] = out.astype(o_ref.dtype)                          # lane-dense store


def prepare_params(params, *, compute_dtype=jnp.float32, activation_dtype=None):
    """Cast/reshape parameters ONCE (reuse across calls).

    compute_dtype:    MXU input dtype for x/w1/w2 (bf16 recommended on all gens).
    activation_dtype: dtype for biases / ReLU intermediates.  Default = compute
                      dtype (good on v6e/v7x); pass jnp.float32 on v5e.
    """
    adt = compute_dtype if activation_dtype is None else activation_dtype
    H = params["w1"].shape[1]
    return {
        "w1": params["w1"].astype(compute_dtype),              # (17, H)
        "b1": params["b1"].reshape(1, H).astype(adt),
        "w2": params["w2"].astype(compute_dtype),              # (H, H)
        "b2": params["b2"].reshape(1, H).astype(adt),
        "w3": params["w3"].reshape(1, H).astype(jnp.float32),  # row vector for reduction
        "b3": params["b3"].reshape(1, 1).astype(jnp.float32),  # scalar -> SMEM
    }


def half_cheetah_critic(x, prep, *, block_b=2048, vmem_budget_bytes=48 << 20):
    """x: (B, 17). prep: output of prepare_params. Returns (B, 1) float32."""
    w1, b1, w2, b2, w3, b3 = (prep[k] for k in ("w1", "b1", "w2", "b2", "w3", "b3"))
    B, obs = x.shape
    H = w1.shape[1]
    x_sz = jnp.dtype(x.dtype).itemsize
    cdt_sz = jnp.dtype(w1.dtype).itemsize
    adt_sz = jnp.dtype(b1.dtype).itemsize

    # ---- batch-tile sizing --------------------------------------------------
    TB_cap = _round_up(max(block_b, 128), 128)
    B128 = _round_up(B, 128)
    if B128 <= 2 * TB_cap:
        # Small batch: aim for two tiles so both v7x TensorCores get work.
        TB = max(128, _round_up(-(-B128 // 2), 128))
    else:
        TB = TB_cap

    def vmem_estimate(tb):
        x_tile = 2 * tb * max(128, _round_up(obs, 128)) * x_sz      # lane-padded, 2 bufs
        out_tile = 2 * 8 * tb * 4                                   # (1,TB) f32, 2 bufs
        weights = (2 * (_round_up(obs, 8) * H * cdt_sz + H * H * cdt_sz)  # conservative 2 bufs
                   + 2 * 8 * H * adt_sz + 8 * H * 4 + 8 * 128 * 4)
        inter = 2 * tb * H * (4 + adt_sz)                           # h1/h2 f32 accum + adt copies
        return int(1.3 * (x_tile + out_tile + weights + inter))

    while TB > 128 and vmem_estimate(TB) > vmem_budget_bytes:
        TB = max(128, _round_up(TB // 2, 128))

    Bp = _round_up(B, TB)
    nb = Bp // TB
    xc = x if Bp == B else jnp.pad(x, ((0, Bp - B), (0, 0)))        # pad only when needed

    vmem_limit = int(min(max(vmem_estimate(TB), 16 << 20), 64 << 20))

    cost = pl.CostEstimate(
        flops=2 * Bp * (obs * H + H * H + H),
        transcendentals=0,
        bytes_accessed=(Bp * obs * x_sz + Bp * 4
                        + (obs * H + H * H) * cdt_sz + 2 * H * adt_sz + (H + 1) * 4),
    )

    def call(single_buffer_weights):
        resident = dict(pipeline_mode=pl.Buffered(1)) if single_buffer_weights else {}
        grid_spec = pltpu.PrefetchScalarGridSpec(
            num_scalar_prefetch=0,
            grid=(nb,),
            in_specs=[
                # x streamed per batch tile (double-buffered by the pipeline).
                pl.BlockSpec((TB, obs), lambda i: (i, 0)),
                # Weights/biases: constant block index -> fetched once,
                # VMEM-resident; single-buffered when supported.
                pl.BlockSpec((obs, H), lambda i: (0, 0), **resident),
                pl.BlockSpec((1, H), lambda i: (0, 0), **resident),
                pl.BlockSpec((H, H), lambda i: (0, 0), **resident),
                pl.BlockSpec((1, H), lambda i: (0, 0), **resident),
                pl.BlockSpec((1, H), lambda i: (0, 0), **resident),
                # b3 scalar lives in SMEM (no VMEM tile wasted on it).
                pl.BlockSpec(memory_space=pltpu.MemorySpace.SMEM),
            ],
            # Lane-dense output slab: batch on the 128-lane axis, tiled on lanes.
            out_specs=pl.BlockSpec((1, TB), lambda i: (0, i)),
        )
        return pl.pallas_call(
            critic_kernel,
            out_shape=jax.ShapeDtypeStruct((1, Bp), jnp.float32),
            grid_spec=grid_spec,
            compiler_params=pltpu.CompilerParams(
                dimension_semantics=("parallel",),   # batch tiles shard across TCs (v7x)
                vmem_limit_bytes=vmem_limit,
            ),
            cost_estimate=cost,
        )(xc, w1, b1, w2, b2, w3, b3)

    try:
        out = call(True)
    except Exception:
        # Older jax without 1-deep pipeline_mode support: fall back to default
        # double buffering of the constant-index weight blocks.
        out = call(False)

    return out.reshape(Bp)[:B].reshape(B, 1)


def init_params(key, hidden_dim, obs_dim=17):
    """Deterministic init mimicking PyTorch's default U(-1/sqrt(fan_in), +...)."""
    ks = jax.random.split(key, 6)

    def uniform(k, shape, fan_in):
        bound = 1.0 / jnp.sqrt(jnp.float32(fan_in))
        return jax.random.uniform(k, shape, jnp.float32, -bound, bound)

    return {
        # stored as (in, out); biases kept 2D for clean TPU broadcast
        "w1": uniform(ks[0], (obs_dim, hidden_dim), obs_dim),
        "b1": uniform(ks[1], (1, hidden_dim), obs_dim),
        "w2": uniform(ks[2], (hidden_dim, hidden_dim), hidden_dim),
        "b2": uniform(ks[3], (1, hidden_dim), hidden_dim),
        "w3": uniform(ks[4], (hidden_dim, 1), hidden_dim),
        "b3": uniform(ks[5], (1, 1), hidden_dim),
    }


def reference_forward(x, p):
    h1 = jnp.maximum(jnp.dot(x, p["w1"], precision="highest") + p["b1"], 0.0)
    h2 = jnp.maximum(jnp.dot(h1, p["w2"], precision="highest") + p["b2"], 0.0)
    return jnp.dot(h2, p["w3"], precision="highest") + p["b3"]


if __name__ == "__main__":
    key = jax.random.PRNGKey(0)
    k_param, k_x = jax.random.split(key)

    hidden_dim = 32
    batch = 8
    obs_dim = 17

    params = init_params(k_param, hidden_dim, obs_dim)
    x = jax.random.normal(k_x, (batch, obs_dim), jnp.float32)

    ref = reference_forward(x, params)

    # f32 path.  Tolerance allows for TPU default f32-matmul precision (may use
    # bf16 MXU passes) while still catching structural bugs.
    prep_f32 = prepare_params(params)
    out_f32 = jax.block_until_ready(half_cheetah_critic(x, prep_f32))
    assert out_f32.shape == (batch, 1)
    assert jnp.allclose(out_f32, ref, atol=1e-2, rtol=1e-2), "f32 mismatch vs reference"

    # bf16 MXU path (valid on v5e/v6e/v7x) — f32 accumulation, looser tolerance.
    prep_bf16 = prepare_params(params, compute_dtype=jnp.bfloat16)
    out_bf16 = jax.block_until_ready(half_cheetah_critic(x, prep_bf16))
    assert out_bf16.shape == (batch, 1)
    assert jnp.allclose(out_bf16, ref, atol=5e-2, rtol=5e-2), "bf16 mismatch vs reference"

    print("KERNEL_OK")
</pallas_src>

<mosaic_0001>
module attributes {stable_mosaic.version = 11 : i64} {
  func.func @critic_kernel(%arg0: i32, %arg1: memref<128x17xf32, #tpu.memory_space<vmem>>, %arg2: memref<17x32xf32, #tpu.memory_space<vmem>>, %arg3: memref<1x32xf32, #tpu.memory_space<vmem>>, %arg4: memref<32x32xf32, #tpu.memory_space<vmem>>, %arg5: memref<1x32xf32, #tpu.memory_space<vmem>>, %arg6: memref<1x32xf32, #tpu.memory_space<vmem>>, %arg7: memref<1x1xf32, #tpu.memory_space<smem>>, %arg8: memref<1x128xf32, #tpu.memory_space<vmem>>) attributes {dimension_semantics = [#tpu.dimension_semantics<parallel>], iteration_bounds = array<i64: 1>, scalar_prefetch = 0 : i64, scratch_operands = 0 : i64, tpu.core_type = #tpu.core_type<tc>, window_params = [{transform_indices = @transform_0, window_bounds = array<i64: 128, 17>}, {pipeline_mode = #tpu.pipeline_mode<synchronous>, transform_indices = @transform_1, window_bounds = array<i64: 17, 32>}, {pipeline_mode = #tpu.pipeline_mode<synchronous>, transform_indices = @transform_2, window_bounds = array<i64: 1, 32>}, {pipeline_mode = #tpu.pipeline_mode<synchronous>, transform_indices = @transform_3, window_bounds = array<i64: 32, 32>}, {pipeline_mode = #tpu.pipeline_mode<synchronous>, transform_indices = @transform_4, window_bounds = array<i64: 1, 32>}, {pipeline_mode = #tpu.pipeline_mode<synchronous>, transform_indices = @transform_5, window_bounds = array<i64: 1, 32>}, {transform_indices = @transform_6, window_bounds = array<i64: 1, 1>}, {transform_indices = @transform_7, window_bounds = array<i64: 1, 128>}]} {
    %c0 = arith.constant 0 : index
    %c0_0 = arith.constant 0 : index
    %0 = vector.load %arg1[%c0, %c0_0] : memref<128x17xf32, #tpu.memory_space<vmem>>, vector<128x17xf32>
    %c0_1 = arith.constant 0 : index
    %c0_2 = arith.constant 0 : index
    %1 = vector.load %arg2[%c0_1, %c0_2] : memref<17x32xf32, #tpu.memory_space<vmem>>, vector<17x32xf32>
    %cst = arith.constant dense<0.000000e+00> : vector<128x32xf32>
    %2 = tpu.matmul %0, %1, %cst {dimension_numbers = #tpu.dot_dimension_numbers<[1], [0], [0], [1], [0, 0, 1, 1], [], []>} : vector<128x17xf32>, vector<17x32xf32>, vector<128x32xf32> -> vector<128x32xf32>
    %c0_3 = arith.constant 0 : index
    %c0_4 = arith.constant 0 : index
    %3 = vector.load %arg3[%c0_3, %c0_4] : memref<1x32xf32, #tpu.memory_space<vmem>>, vector<1x32xf32>
    %4 = vector.broadcast %3 : vector<1x32xf32> to vector<128x32xf32>
    %5 = arith.addf %2, %4 : vector<128x32xf32>
    %cst_5 = arith.constant 0.000000e+00 : f32
    %6 = vector.broadcast %cst_5 : f32 to vector<128x32xf32>
    %7 = arith.maximumf %5, %6 : vector<128x32xf32>
    %c0_6 = arith.constant 0 : index
    %c0_7 = arith.constant 0 : index
    %8 = vector.load %arg4[%c0_6, %c0_7] : memref<32x32xf32, #tpu.memory_space<vmem>>, vector<32x32xf32>
    %cst_8 = arith.constant dense<0.000000e+00> : vector<128x32xf32>
    %9 = tpu.matmul %7, %8, %cst_8 {dimension_numbers = #tpu.dot_dimension_numbers<[1], [0], [0], [1], [0, 0, 1, 1], [], []>} : vector<128x32xf32>, vector<32x32xf32>, vector<128x32xf32> -> vector<128x32xf32>
    %c0_9 = arith.constant 0 : index
    %c0_10 = arith.constant 0 : index
    %10 = vector.load %arg5[%c0_9, %c0_10] : memref<1x32xf32, #tpu.memory_space<vmem>>, vector<1x32xf32>
    %11 = vector.broadcast %10 : vector<1x32xf32> to vector<128x32xf32>
    %12 = arith.addf %9, %11 : vector<128x32xf32>
    %cst_11 = arith.constant 0.000000e+00 : f32
    %13 = vector.broadcast %cst_11 : f32 to vector<128x32xf32>
    %14 = arith.maximumf %12, %13 : vector<128x32xf32>
    %c0_12 = arith.constant 0 : index
    %c0_13 = arith.constant 0 : index
    %15 = vector.load %arg6[%c0_12, %c0_13] : memref<1x32xf32, #tpu.memory_space<vmem>>, vector<1x32xf32>
    %16 = vector.broadcast %15 : vector<1x32xf32> to vector<128x32xf32>
    %17 = arith.mulf %14, %16 : vector<128x32xf32>
    %cst_14 = arith.constant dense<0.000000e+00> : vector<128xf32>
    %18 = vector.multi_reduction <add>, %17, %cst_14 [1] : vector<128x32xf32> to vector<128xf32>
    %c0_15 = arith.constant 0 : index
    %c0_16 = arith.constant 0 : index
    %19 = memref.load %arg7[%c0_15, %c0_16] : memref<1x1xf32, #tpu.memory_space<smem>>
    %20 = vector.broadcast %19 : f32 to vector<128xf32>
    %21 = arith.addf %18, %20 : vector<128xf32>
    %c0_17 = arith.constant 0 : index
    %c0_18 = arith.constant 0 : index
    %22 = vector.load %arg8[%c0_17, %c0_18] : memref<1x128xf32, #tpu.memory_space<vmem>>, vector<1x128xf32>
    %23 = vector.shape_cast %22 : vector<1x128xf32> to vector<128xf32>
    %24 = vector.shape_cast %21 : vector<128xf32> to vector<1x128xf32>
    tpu.vector_store %arg8[%c0_17, %c0_18], %24 {strides = array<i32>} : memref<1x128xf32, #tpu.memory_space<vmem>>, vector<1x128xf32>,
    return
  }
  func.func @transform_0(%arg0: i32) -> (i32, i32) {
    %c0_i32 = arith.constant 0 : i32
    %c0_i32_0 = arith.constant 0 : i32
    return %arg0, %c0_i32 : i32, i32
  }
  func.func @transform_1(%arg0: i32) -> (i32, i32) {
    %c0_i32 = arith.constant 0 : i32
    %c0_i32_0 = arith.constant 0 : i32
    %c0_i32_1 = arith.constant 0 : i32
    return %c0_i32, %c0_i32_0 : i32, i32
  }
  func.func @transform_2(%arg0: i32) -> (i32, i32) {
    %c0_i32 = arith.constant 0 : i32
    %c0_i32_0 = arith.constant 0 : i32
    %c0_i32_1 = arith.constant 0 : i32
    return %c0_i32, %c0_i32_0 : i32, i32
  }
  func.func @transform_3(%arg0: i32) -> (i32, i32) {
    %c0_i32 = arith.constant 0 : i32
    %c0_i32_0 = arith.constant 0 : i32
    %c0_i32_1 = arith.constant 0 : i32
    return %c0_i32, %c0_i32_0 : i32, i32
  }
  func.func @transform_4(%arg0: i32) -> (i32, i32) {
    %c0_i32 = arith.constant 0 : i32
    %c0_i32_0 = arith.constant 0 : i32
    %c0_i32_1 = arith.constant 0 : i32
    return %c0_i32, %c0_i32_0 : i32, i32
  }
  func.func @transform_5(%arg0: i32) -> (i32, i32) {
    %c0_i32 = arith.constant 0 : i32
    %c0_i32_0 = arith.constant 0 : i32
    %c0_i32_1 = arith.constant 0 : i32
    return %c0_i32, %c0_i32_0 : i32, i32
  }
  func.func @transform_6(%arg0: i32) -> (i32, i32) {
    %c0_i32 = arith.constant 0 : i32
    %c0_i32_0 = arith.constant 0 : i32
    %c0_i32_1 = arith.constant 0 : i32
    return %c0_i32, %c0_i32_0 : i32, i32
  }
  func.func @transform_7(%arg0: i32) -> (i32, i32) {
    %c0_i32 = arith.constant 0 : i32
    %c0_i32_0 = arith.constant 0 : i32
    return %c0_i32, %arg0 : i32, i32
  }
}

module attributes {stable_mosaic.version = 11 : i64} {
  func.func @critic_kernel(%arg0: i32, %arg1: memref<128x17xf32, #tpu.memory_space<vmem>>, %arg2: memref<17x32xf32, #tpu.memory_space<vmem>>, %arg3: memref<1x32xf32, #tpu.memory_space<vmem>>, %arg4: memref<32x32xf32, #tpu.memory_space<vmem>>, %arg5: memref<1x32xf32, #tpu.memory_space<vmem>>, %arg6: memref<1x32xf32, #tpu.memory_space<vmem>>, %arg7: memref<1x1xf32, #tpu.memory_space<smem>>, %arg8: memref<1x128xf32, #tpu.memory_space<vmem>>) attributes {dimension_semantics = [#tpu.dimension_semantics<parallel>], iteration_bounds = array<i64: 1>, scalar_prefetch = 0 : i64, scratch_operands = 0 : i64, tpu.core_type = #tpu.core_type<tc>, window_params = [{transform_indices = @transform_0, window_bounds = array<i64: 128, 17>}, {pipeline_mode = #tpu.pipeline_mode<synchronous>, transform_indices = @transform_1, window_bounds = array<i64: 17, 32>}, {pipeline_mode = #tpu.pipeline_mode<synchronous>, transform_indices = @transform_2, window_bounds = array<i64: 1, 32>}, {pipeline_mode = #tpu.pipeline_mode<synchronous>, transform_indices = @transform_3, window_bounds = array<i64: 32, 32>}, {pipeline_mode = #tpu.pipeline_mode<synchronous>, transform_indices = @transform_4, window_bounds = array<i64: 1, 32>}, {pipeline_mode = #tpu.pipeline_mode<synchronous>, transform_indices = @transform_5, window_bounds = array<i64: 1, 32>}, {transform_indices = @transform_6, window_bounds = array<i64: 1, 1>}, {transform_indices = @transform_7, window_bounds = array<i64: 1, 128>}]} {
    %c0 = arith.constant 0 : index
    %c0_0 = arith.constant 0 : index
    %0 = vector.load %arg1[%c0, %c0_0] : memref<128x17xf32, #tpu.memory_space<vmem>>, vector<128x17xf32>
    %c0_1 = arith.constant 0 : index
    %c0_2 = arith.constant 0 : index
    %1 = vector.load %arg2[%c0_1, %c0_2] : memref<17x32xf32, #tpu.memory_space<vmem>>, vector<17x32xf32>
    %cst = arith.constant dense<0.000000e+00> : vector<128x32xf32>
    %2 = tpu.matmul %0, %1, %cst {dimension_numbers = #tpu.dot_dimension_numbers<[1], [0], [0], [1], [0, 0, 1, 1], [], []>} : vector<128x17xf32>, vector<17x32xf32>, vector<128x32xf32> -> vector<128x32xf32>
    %c0_3 = arith.constant 0 : index
    %c0_4 = arith.constant 0 : index
    %3 = vector.load %arg3[%c0_3, %c0_4] : memref<1x32xf32, #tpu.memory_space<vmem>>, vector<1x32xf32>
    %4 = vector.broadcast %3 : vector<1x32xf32> to vector<128x32xf32>
    %5 = arith.addf %2, %4 : vector<128x32xf32>
    %cst_5 = arith.constant 0.000000e+00 : f32
    %6 = vector.broadcast %cst_5 : f32 to vector<128x32xf32>
    %7 = arith.maximumf %5, %6 : vector<128x32xf32>
    %c0_6 = arith.constant 0 : index
    %c0_7 = arith.constant 0 : index
    %8 = vector.load %arg4[%c0_6, %c0_7] : memref<32x32xf32, #tpu.memory_space<vmem>>, vector<32x32xf32>
    %cst_8 = arith.constant dense<0.000000e+00> : vector<128x32xf32>
    %9 = tpu.matmul %7, %8, %cst_8 {dimension_numbers = #tpu.dot_dimension_numbers<[1], [0], [0], [1], [0, 0, 1, 1], [], []>} : vector<128x32xf32>, vector<32x32xf32>, vector<128x32xf32> -> vector<128x32xf32>
    %c0_9 = arith.constant 0 : index
    %c0_10 = arith.constant 0 : index
    %10 = vector.load %arg5[%c0_9, %c0_10] : memref<1x32xf32, #tpu.memory_space<vmem>>, vector<1x32xf32>
    %11 = vector.broadcast %10 : vector<1x32xf32> to vector<128x32xf32>
    %12 = arith.addf %9, %11 : vector<128x32xf32>
    %cst_11 = arith.constant 0.000000e+00 : f32
    %13 = vector.broadcast %cst_11 : f32 to vector<128x32xf32>
    %14 = arith.maximumf %12, %13 : vector<128x32xf32>
    %c0_12 = arith.constant 0 : index
    %c0_13 = arith.constant 0 : index
    %15 = vector.load %arg6[%c0_12, %c0_13] : memref<1x32xf32, #tpu.memory_space<vmem>>, vector<1x32xf32>
    %16 = vector.broadcast %15 : vector<1x32xf32> to vector<128x32xf32>
    %17 = arith.mulf %14, %16 : vector<128x32xf32>
    %cst_14 = arith.constant dense<0.000000e+00> : vector<128xf32>
    %18 = vector.multi_reduction <add>, %17, %cst_14 [1] : vector<128x32xf32> to vector<128xf32>
    %c0_15 = arith.constant 0 : index
    %c0_16 = arith.constant 0 : index
    %19 = memref.load %arg7[%c0_15, %c0_16] : memref<1x1xf32, #tpu.memory_space<smem>>
    %20 = vector.broadcast %19 : f32 to vector<128xf32>
    %21 = arith.addf %18, %20 : vector<128xf32>
    %c0_17 = arith.constant 0 : index
    %c0_18 = arith.constant 0 : index
    %22 = vector.load %arg8[%c0_17, %c0_18] : memref<1x128xf32, #tpu.memory_space<vmem>>, vector<1x128xf32>
    %23 = vector.shape_cast %22 : vector<1x128xf32> to vector<128xf32>
    %24 = vector.shape_cast %21 : vector<128xf32> to vector<1x128xf32>
    tpu.vector_store %arg8[%c0_17, %c0_18], %24 {strides = array<i32>} : memref<1x128xf32, #tpu.memory_space<vmem>>, vector<1x128xf32>,
    return
  }
  func.func @transform_0(%arg0: i32) -> (i32, i32) {
    %c0_i32 = arith.constant 0 : i32
    %c0_i32_0 = arith.constant 0 : i32
    return %arg0, %c0_i32 : i32, i32
  }
  func.func @transform_1(%arg0: i32) -> (i32, i32) {
    %c0_i32 = arith.constant 0 : i32
    %c0_i32_0 = arith.constant 0 : i32
    %c0_i32_1 = arith.constant 0 : i32
    return %c0_i32, %c0_i32_0 : i32, i32
  }
  func.func @transform_2(%arg0: i32) -> (i32, i32) {
    %c0_i32 = arith.constant 0 : i32
    %c0_i32_0 = arith.constant 0 : i32
    %c0_i32_1 = arith.constant 0 : i32
    return %c0_i32, %c0_i32_0 : i32, i32
  }
  func.func @transform_3(%arg0: i32) -> (i32, i32) {
    %c0_i32 = arith.constant 0 : i32
    %c0_i32_0 = arith.constant 0 : i32
    %c0_i32_1 = arith.constant 0 : i32
    return %c0_i32, %c0_i32_0 : i32, i32
  }
  func.func @transform_4(%arg0: i32) -> (i32, i32) {
    %c0_i32 = arith.constant 0 : i32
    %c0_i32_0 = arith.constant 0 : i32
    %c0_i32_1 = arith.constant 0 : i32
    return %c0_i32, %c0_i32_0 : i32, i32
  }
  func.func @transform_5(%arg0: i32) -> (i32, i32) {
    %c0_i32 = arith.constant 0 : i32
    %c0_i32_0 = arith.constant 0 : i32
    %c0_i32_1 = arith.constant 0 : i32
    return %c0_i32, %c0_i32_0 : i32, i32
  }
  func.func @transform_6(%arg0: i32) -> (i32, i32) {
    %c0_i32 = arith.constant 0 : i32
    %c0_i32_0 = arith.constant 0 : i32
    %c0_i32_1 = arith.constant 0 : i32
    return %c0_i32, %c0_i32_0 : i32, i32
  }
  func.func @transform_7(%arg0: i32) -> (i32, i32) {
    %c0_i32 = arith.constant 0 : i32
    %c0_i32_0 = arith.constant 0 : i32
    return %c0_i32, %arg0 : i32, i32
  }
}

</mosaic_0001>

<llo_original>
// kernel: tpu_custom_call.1
$region0: #{tpu_custom_call.1}
  #allocation0 [shape = 'u32[]', space=smem, size = 0x4, offset = 0x4, fixed_abs, tag = 'smem constant byte address 0x4 - core index']
  #allocation1 [shape = 'u32[144,128]{1,0:T(1,128)}', space=vmem, size = 0x12000, scoped, tag = 'internal scratch']
  #allocation2 [shape = 'f32[1,1]{1,0:T(1,128)S(6)}', space=smem, size = 0x200, scoped, tag = 'scoped memory for tpu_custom_call.1']
  %s0 = inlined_call_operand.vmem [shape: f32[128,17], index: 0, kind: input, shape index: {}]
  %s1 = inlined_call_operand.vmem [shape: f32[17,32], index: 1, kind: input, shape index: {}]
  %s2 = inlined_call_operand.vmem [shape: f32[1,32], index: 2, kind: input, shape index: {}]
  %s3 = inlined_call_operand.vmem [shape: f32[32,32], index: 3, kind: input, shape index: {}]
  %s4 = inlined_call_operand.vmem [shape: f32[1,32], index: 4, kind: input, shape index: {}]
  %s5 = inlined_call_operand.vmem [shape: f32[1,32], index: 5, kind: input, shape index: {}]
  %s6 = inlined_call_operand.<no memory space> [shape: f32[1,1], index: 6, kind: input, shape index: {}]
  %s7 = inlined_call_operand.hbm [shape: f32[1,128], index: 7, kind: output, shape index: {}]
  %s8 = sld [smem:[#allocation0]]
  $region38: #{tpu_custom_call.1} parent=0
    _
  %s10 = ssub.s32 1, %s8
  %s11 = scalar_select 0, %s10, %s8
  %12 = sst [smem:[#allocation2]] %s6
  $region1: #{tpu_custom_call.1} parent=0
    #allocation3 [shape = 'u8[512]{0}', space=vmem, size = 0x400, scoped, tag = 'output window, operand 0, single buffered']
    #allocation4 [shape = 's32[1]{0}', space=sflag, size = 0x4, scoped, tag = 'scoped memory for tpu_custom_call.1']
    %13 = vsyncpa [#allocation4], 0
    // Predicated region
    $region2: #{tpu_custom_call.1} parent=1 // pred_check
      _
    $region3: #{tpu_custom_call.1} parent=1 // pred_check_branch
      %15 = sbr.rel (0) target = $region5
    $region4: #{tpu_custom_call.1} parent=1 // pred_region
      _
    $region5: #{tpu_custom_call.1} parent=1 // pred_fallthru
      _
    // Predicated region
    $region6: #{tpu_custom_call.1} parent=1 // pred_check
      _
    $region7: #{tpu_custom_call.1} parent=1 // pred_check_branch
      %17 = sbr.rel (0) target = $region9
    $region8: #{tpu_custom_call.1} parent=1 // pred_region
      _
    $region9: #{tpu_custom_call.1} parent=1 // pred_fallthru
      _
    // Predicated region
    $region10: #{tpu_custom_call.1} parent=1 // pred_check
      _
    $region11: #{tpu_custom_call.1} parent=1 // pred_check_branch
      %19 = sbr.rel (0) target = $region13
    $region12: #{tpu_custom_call.1} parent=1 // pred_region
      _
    $region13: #{tpu_custom_call.1} parent=1 // pred_fallthru
      _
    // Predicated region
    $region14: #{tpu_custom_call.1} parent=1 // pred_check
      _
    $region15: #{tpu_custom_call.1} parent=1 // pred_check_branch
      %21 = sbr.rel (0) target = $region17
    $region16: #{tpu_custom_call.1} parent=1 // pred_region
      _
    $region17: #{tpu_custom_call.1} parent=1 // pred_fallthru
      _
    // Predicated region
    $region18: #{tpu_custom_call.1} parent=1 // pred_check
      _
    $region19: #{tpu_custom_call.1} parent=1 // pred_check_branch
      %23 = sbr.rel (0) target = $region21
    $region20: #{tpu_custom_call.1} parent=1 // pred_region
      _
    $region21: #{tpu_custom_call.1} parent=1 // pred_fallthru
      _
    // Predicated region
    $region22: #{tpu_custom_call.1} parent=1 // pred_check
      _
    $region23: #{tpu_custom_call.1} parent=1 // pred_check_branch
      %25 = sbr.rel (0) target = $region25
    $region24: #{tpu_custom_call.1} parent=1 // pred_region
      _
    $region25: #{tpu_custom_call.1} parent=1 // pred_fallthru
      _
    // Predicated region
    $region26: #{tpu_custom_call.1} parent=1 // pred_check
      _
    $region27: #{tpu_custom_call.1} parent=1 // pred_check_branch
      %27 = sbr.rel (0) target = $region29
    $region28: #{tpu_custom_call.1} parent=1 // pred_region
      _
    $region29: #{tpu_custom_call.1} parent=1 // pred_fallthru
      _
    %v28 = vld [vmem:[%s0] sm:$0xff]
    %v29 = vld [vmem:[%s0 + $0x8] sm:$0xff]
    %v30 = vld [vmem:[%s0 + $0x10] sm:$0xff]
    %v31 = vld [vmem:[%s0 + $0x18] sm:$0xff]
    %v32 = vld [vmem:[%s0 + $0x20] sm:$0xff]
    %v33 = vld [vmem:[%s0 + $0x28] sm:$0xff]
    %v34 = vld [vmem:[%s0 + $0x30] sm:$0xff]
    %v35 = vld [vmem:[%s0 + $0x38] sm:$0xff]
    %v36 = vld [vmem:[%s0 + $0x40] sm:$0xff]
    %v37 = vld [vmem:[%s0 + $0x48] sm:$0xff]
    %v38 = vld [vmem:[%s0 + $0x50] sm:$0xff]
    %v39 = vld [vmem:[%s0 + $0x58] sm:$0xff]
    %v40 = vld [vmem:[%s0 + $0x60] sm:$0xff]
    %v41 = vld [vmem:[%s0 + $0x68] sm:$0xff]
    %v42 = vld [vmem:[%s0 + $0x70] sm:$0xff]
    %v43 = vld [vmem:[%s0 + $0x78] sm:$0xff]
    %v44 = vld [vmem:[%s1] sm:$0xff]
    %v45 = vld [vmem:[%s1 + $0x8] sm:$0xff]
    %v46 = vld [vmem:[%s1 + $0x10] sm:$0x1]
    %v47 = vld [vmem:[%s2] sm:$0x1]
    %v49 = vlaneseq
    %v50 = vshrl.u32 %v49, 7
    %v51 = vsub.s32 0, %v50
    %v52 = vrot.slane %v47, %v51
    %vm54 = vcmask 138240
    %v56 = vsel %vm54, %v28, 0
    %v59 = vsel %vm54, %v29, 0
    %v62 = vsel %vm54, %v30, 0
    %v65 = vsel %vm54, %v31, 0
    %v68 = vsel %vm54, %v32, 0
    %v71 = vsel %vm54, %v33, 0
    %v74 = vsel %vm54, %v34, 0
    %v77 = vsel %vm54, %v35, 0
    %v80 = vsel %vm54, %v36, 0
    %v83 = vsel %vm54, %v37, 0
    %v86 = vsel %vm54, %v38, 0
    %v89 = vsel %vm54, %v39, 0
    %v92 = vsel %vm54, %v40, 0
    %v95 = vsel %vm54, %v41, 0
    %v98 = vsel %vm54, %v42, 0
    %v101 = vsel %vm54, %v43, 0
    %vm103 = vcmask 1040384
    %v105 = vsel %vm103, %v46, 0
    %107 = vmatprep.subr.mxu0 0.0
    %108 = vmatpush1.msra.mxu0 %v44
    %109 = vmatprep.subr.mxu0 0.0
    %110 = vmatpush1.msra.mxu0 %v45
    %111 = vmatprep.subr.mxu0 0.0
    %112 = vmatpush1.msra.mxu0 %v105
    %113 = vmatprep.subr.mxu0 0.0
    %114 = vmatpush1.msra.mxu0 0.0
    %115 = vmatprep.subr.mxu0 0.0
    %116 = vmatpush1.msra.mxu0 0.0
    %117 = vmatprep.subr.mxu0 0.0
    %118 = vmatpush1.msra.mxu0 0.0
    %119 = vmatprep.subr.mxu0 0.0
    %120 = vmatpush1.msra.mxu0 0.0
    %121 = vmatprep.subr.mxu0 0.0
    %122 = vmatpush1.msra.mxu0 0.0
    %123 = vmatprep.subr.mxu0 0.0
    %124 = vmatpush1.msra.mxu0 0.0
    %125 = vmatprep.subr.mxu0 0.0
    %126 = vmatpush1.msra.mxu0 0.0
    %127 = vmatprep.subr.mxu0 0.0
    %128 = vmatpush1.msra.mxu0 0.0
    %129 = vmatprep.subr.mxu0 0.0
    %130 = vmatpush1.msra.mxu0 0.0
    %131 = vmatprep.subr.mxu0 0.0
    %132 = vmatpush1.msra.mxu0 0.0
    %133 = vmatprep.subr.mxu0 0.0
    %134 = vmatpush1.msra.mxu0 0.0
    %135 = vmatprep.subr.mxu0 0.0
    %136 = vmatpush1.msra.mxu0 0.0
    %137 = vmatprep.subr.mxu0 0.0
    %138 = vmatpush1.msra.mxu0 0.0
    %139 = vmatprep.subr.mxu0 0.0
    %140 = vmatpush1.msra.mxu0 0.0
    %141 = vmatprep.subr.mxu0 0.0
    %142 = vmatpush1.msra.mxu0 0.0
    %143 = vmatprep.subr.mxu0 0.0
    %144 = vmatpush1.msra.mxu0 0.0
    %145 = vmatprep.subr.mxu0 0.0
    %146 = vmatpush1.msra.mxu0 0.0
    %147 = vmatprep.subr.mxu0 0.0
    %148 = vmatpush1.msra.mxu0 0.0
    %149 = vmatprep.subr.mxu0 0.0
    %150 = vmatpush1.msra.mxu0 0.0
    %151 = vmatprep.subr.mxu0 0.0
    %152 = vmatpush1.msra.mxu0 0.0
    %153 = vmatprep.subr.mxu0 0.0
    %154 = vmatpush1.msra.mxu0 0.0
    %155 = vmatprep.subr.mxu0 0.0
    %156 = vmatpush1.msra.mxu0 0.0
    %157 = vmatprep.subr.mxu0 0.0
    %158 = vmatpush1.msra.mxu0 0.0
    %159 = vmatprep.subr.mxu0 0.0
    %160 = vmatpush1.msra.mxu0 0.0
    %161 = vmatprep.subr.mxu0 0.0
    %162 = vmatpush1.msra.mxu0 0.0
    %163 = vmatprep.subr.mxu0 0.0
    %164 = vmatpush1.msra.mxu0 0.0
    %165 = vmatprep.subr.mxu0 0.0
    %166 = vmatpush1.msra.mxu0 0.0
    %167 = vmatprep.subr.mxu0 0.0
    %168 = vmatpush1.msra.mxu0 0.0
    %169 = vmatprep.subr.mxu0 0.0
    %170 = vmatpush1.msra.mxu0 0.0
    %171 = vmatprep.mubr.f32.mxu0 0.0
    %172 = vmatmul.mubr.f32.gmra.mrb[0].mxu0 %v56
    %v173 = vpop.f32.mrb[0].mxu0
    %v174 = vadd.f32 %v52, %v173
    %v175 = vpop.f32.mrb[0].mxu0
    %176 = vmatprep.mubr.f32.mxu0 0.0
    %177 = vmatmul.mubr.f32.gmra.mrb[0].mxu0 %v59
    %v178 = vpop.f32.mrb[0].mxu0
    %v179 = vadd.f32 %v52, %v178
    %v180 = vpop.f32.mrb[0].mxu0
    %181 = vmatprep.mubr.f32.mxu0 0.0
    %182 = vmatmul.mubr.f32.gmra.mrb[0].mxu0 %v62
    %v183 = vpop.f32.mrb[0].mxu0
    %v184 = vadd.f32 %v52, %v183
    %v185 = vpop.f32.mrb[0].mxu0
    %186 = vmatprep.mubr.f32.mxu0 0.0
    %187 = vmatmul.mubr.f32.gmra.mrb[0].mxu0 %v65
    %v188 = vpop.f32.mrb[0].mxu0
    %v189 = vadd.f32 %v52, %v188
    %v190 = vpop.f32.mrb[0].mxu0
    %191 = vmatprep.mubr.f32.mxu0 0.0
    %192 = vmatmul.mubr.f32.gmra.mrb[0].mxu0 %v68
    %v193 = vpop.f32.mrb[0].mxu0
    %v194 = vadd.f32 %v52, %v193
    %v195 = vpop.f32.mrb[0].mxu0
    %196 = vmatprep.mubr.f32.mxu0 0.0
    %197 = vmatmul.mubr.f32.gmra.mrb[0].mxu0 %v71
    %v198 = vpop.f32.mrb[0].mxu0
    %v199 = vadd.f32 %v52, %v198
    %v200 = vpop.f32.mrb[0].mxu0
    %201 = vmatprep.mubr.f32.mxu0 0.0
    %202 = vmatmul.mubr.f32.gmra.mrb[0].mxu0 %v74
    %v203 = vpop.f32.mrb[0].mxu0
    %v204 = vadd.f32 %v52, %v203
    %v205 = vpop.f32.mrb[0].mxu0
    %206 = vmatprep.mubr.f32.mxu0 0.0
    %207 = vmatmul.mubr.f32.gmra.mrb[0].mxu0 %v77
    %v208 = vpop.f32.mrb[0].mxu0
    %v209 = vadd.f32 %v52, %v208
    %v210 = vpop.f32.mrb[0].mxu0
    %211 = vmatprep.mubr.f32.mxu0 0.0
    %212 = vmatmul.mubr.f32.gmra.mrb[0].mxu0 %v80
    %v213 = vpop.f32.mrb[0].mxu0
    %v214 = vadd.f32 %v52, %v213
    %v215 = vpop.f32.mrb[0].mxu0
    %216 = vmatprep.mubr.f32.mxu0 0.0
    %217 = vmatmul.mubr.f32.gmra.mrb[0].mxu0 %v83
    %v218 = vpop.f32.mrb[0].mxu0
    %v219 = vadd.f32 %v52, %v218
    %v220 = vpop.f32.mrb[0].mxu0
    %221 = vmatprep.mubr.f32.mxu0 0.0
    %222 = vmatmul.mubr.f32.gmra.mrb[0].mxu0 %v86
    %v223 = vpop.f32.mrb[0].mxu0
    %v224 = vadd.f32 %v52, %v223
    %v225 = vpop.f32.mrb[0].mxu0
    %226 = vmatprep.mubr.f32.mxu0 0.0
    %227 = vmatmul.mubr.f32.gmra.mrb[0].mxu0 %v89
    %v228 = vpop.f32.mrb[0].mxu0
    %v229 = vadd.f32 %v52, %v228
    %v230 = vpop.f32.mrb[0].mxu0
    %231 = vmatprep.mubr.f32.mxu0 0.0
    %232 = vmatmul.mubr.f32.gmra.mrb[0].mxu0 %v92
    %v233 = vpop.f32.mrb[0].mxu0
    %v234 = vadd.f32 %v52, %v233
    %v235 = vpop.f32.mrb[0].mxu0
    %236 = vmatprep.mubr.f32.mxu0 0.0
    %237 = vmatmul.mubr.f32.gmra.mrb[0].mxu0 %v95
    %v238 = vpop.f32.mrb[0].mxu0
    %v239 = vadd.f32 %v52, %v238
    %v240 = vpop.f32.mrb[0].mxu0
    %241 = vmatprep.mubr.f32.mxu0 0.0
    %242 = vmatmul.mubr.f32.gmra.mrb[0].mxu0 %v98
    %v243 = vpop.f32.mrb[0].mxu0
    %v244 = vadd.f32 %v52, %v243
    %v245 = vpop.f32.mrb[0].mxu0
    %246 = vmatprep.mubr.f32.mxu0 0.0
    %247 = vmatmul.mubr.f32.gmra.mrb[0].mxu0 %v101
    %v248 = vpop.f32.mrb[0].mxu0
    %v249 = vadd.f32 %v52, %v248
    %v250 = vpop.f32.mrb[0].mxu0
    %251 = vdwg.mxu0
    %v252 = vmax.f32 %v174, 0.0
    %v253 = vmax.f32 %v179, 0.0
    %v254 = vmax.f32 %v184, 0.0
    %v255 = vmax.f32 %v189, 0.0
    %v256 = vmax.f32 %v194, 0.0
    %v257 = vmax.f32 %v199, 0.0
    %v258 = vmax.f32 %v204, 0.0
    %v259 = vmax.f32 %v209, 0.0
    %v260 = vmax.f32 %v214, 0.0
    %v261 = vmax.f32 %v219, 0.0
    %v262 = vmax.f32 %v224, 0.0
    %v263 = vmax.f32 %v229, 0.0
    %v264 = vmax.f32 %v234, 0.0
    %v265 = vmax.f32 %v239, 0.0
    %v266 = vmax.f32 %v244, 0.0
    %v267 = vmax.f32 %v249, 0.0
    %v268 = vld [vmem:[%s3] sm:$0xff]
    %v269 = vld [vmem:[%s3 + $0x8] sm:$0xff]
    %v270 = vld [vmem:[%s3 + $0x10] sm:$0xff]
    %v271 = vld [vmem:[%s3 + $0x18] sm:$0xff]
    %v272 = vld [vmem:[%s4] sm:$0x1]
    %v274 = vlaneseq
    %v275 = vshrl.u32 %v274, 7
    %v276 = vsub.s32 0, %v275
    %v277 = vrot.slane %v272, %v276
    %vm279 = vcmask 261120
    %v281 = vsel %vm279, %v252, 0
    %v284 = vsel %vm279, %v253, 0
    %v287 = vsel %vm279, %v254, 0
    %v290 = vsel %vm279, %v255, 0
    %v293 = vsel %vm279, %v256, 0
    %v296 = vsel %vm279, %v257, 0
    %v299 = vsel %vm279, %v258, 0
    %v302 = vsel %vm279, %v259, 0
    %v305 = vsel %vm279, %v260, 0
    %v308 = vsel %vm279, %v261, 0
    %v311 = vsel %vm279, %v262, 0
    %v314 = vsel %vm279, %v263, 0
    %v317 = vsel %vm279, %v264, 0
    %v320 = vsel %vm279, %v265, 0
    %v323 = vsel %vm279, %v266, 0
    %v326 = vsel %vm279, %v267, 0
    %328 = vmatprep.subr.mxu0 0.0
    %329 = vmatpush1.msra.mxu0 %v268
    %330 = vmatprep.subr.mxu0 0.0
    %331 = vmatpush1.msra.mxu0 %v269
    %332 = vmatprep.subr.mxu0 0.0
    %333 = vmatpush1.msra.mxu0 %v270
    %334 = vmatprep.subr.mxu0 0.0
    %335 = vmatpush1.msra.mxu0 %v271
    %336 = vmatprep.subr.mxu0 0.0
    %337 = vmatpush1.msra.mxu0 0.0
    %338 = vmatprep.subr.mxu0 0.0
    %339 = vmatpush1.msra.mxu0 0.0
    %340 = vmatprep.subr.mxu0 0.0
    %341 = vmatpush1.msra.mxu0 0.0
    %342 = vmatprep.subr.mxu0 0.0
    %343 = vmatpush1.msra.mxu0 0.0
    %344 = vmatprep.subr.mxu0 0.0
    %345 = vmatpush1.msra.mxu0 0.0
    %346 = vmatprep.subr.mxu0 0.0
    %347 = vmatpush1.msra.mxu0 0.0
    %348 = vmatprep.subr.mxu0 0.0
    %349 = vmatpush1.msra.mxu0 0.0
    %350 = vmatprep.subr.mxu0 0.0
    %351 = vmatpush1.msra.mxu0 0.0
    %352 = vmatprep.subr.mxu0 0.0
    %353 = vmatpush1.msra.mxu0 0.0
    %354 = vmatprep.subr.mxu0 0.0
    %355 = vmatpush1.msra.mxu0 0.0
    %356 = vmatprep.subr.mxu0 0.0
    %357 = vmatpush1.msra.mxu0 0.0
    %358 = vmatprep.subr.mxu0 0.0
    %359 = vmatpush1.msra.mxu0 0.0
    %360 = vmatprep.subr.mxu0 0.0
    %361 = vmatpush1.msra.mxu0 0.0
    %362 = vmatprep.subr.mxu0 0.0
    %363 = vmatpush1.msra.mxu0 0.0
    %364 = vmatprep.subr.mxu0 0.0
    %365 = vmatpush1.msra.mxu0 0.0
    %366 = vmatprep.subr.mxu0 0.0
    %367 = vmatpush1.msra.mxu0 0.0
    %368 = vmatprep.subr.mxu0 0.0
    %369 = vmatpush1.msra.mxu0 0.0
    %370 = vmatprep.subr.mxu0 0.0
    %371 = vmatpush1.msra.mxu0 0.0
    %372 = vmatprep.subr.mxu0 0.0
    %373 = vmatpush1.msra.mxu0 0.0
    %374 = vmatprep.subr.mxu0 0.0
    %375 = vmatpush1.msra.mxu0 0.0
    %376 = vmatprep.subr.mxu0 0.0
    %377 = vmatpush1.msra.mxu0 0.0
    %378 = vmatprep.subr.mxu0 0.0
    %379 = vmatpush1.msra.mxu0 0.0
    %380 = vmatprep.subr.mxu0 0.0
    %381 = vmatpush1.msra.mxu0 0.0
    %382 = vmatprep.subr.mxu0 0.0
    %383 = vmatpush1.msra.mxu0 0.0
    %384 = vmatprep.subr.mxu0 0.0
    %385 = vmatpush1.msra.mxu0 0.0
    %386 = vmatprep.subr.mxu0 0.0
    %387 = vmatpush1.msra.mxu0 0.0
    %388 = vmatprep.subr.mxu0 0.0
    %389 = vmatpush1.msra.mxu0 0.0
    %390 = vmatprep.subr.mxu0 0.0
    %391 = vmatpush1.msra.mxu0 0.0
    %392 = vmatprep.mubr.f32.mxu0 0.0
    %393 = vmatmul.mubr.f32.gmra.mrb[0].mxu0 %v281
    %v394 = vpop.f32.mrb[0].mxu0
    %v395 = vadd.f32 %v277, %v394
    %v396 = vpop.f32.mrb[0].mxu0
    %397 = vmatprep.mubr.f32.mxu0 0.0
    %398 = vmatmul.mubr.f32.gmra.mrb[0].mxu0 %v284
    %v399 = vpop.f32.mrb[0].mxu0
    %v400 = vadd.f32 %v277, %v399
    %v401 = vpop.f32.mrb[0].mxu0
    %402 = vmatprep.mubr.f32.mxu0 0.0
    %403 = vmatmul.mubr.f32.gmra.mrb[0].mxu0 %v287
    %v404 = vpop.f32.mrb[0].mxu0
    %v405 = vadd.f32 %v277, %v404
    %v406 = vpop.f32.mrb[0].mxu0
    %407 = vmatprep.mubr.f32.mxu0 0.0
    %408 = vmatmul.mubr.f32.gmra.mrb[0].mxu0 %v290
    %v409 = vpop.f32.mrb[0].mxu0
    %v410 = vadd.f32 %v277, %v409
    %v411 = vpop.f32.mrb[0].mxu0
    %412 = vmatprep.mubr.f32.mxu0 0.0
    %413 = vmatmul.mubr.f32.gmra.mrb[0].mxu0 %v293
    %v414 = vpop.f32.mrb[0].mxu0
    %v415 = vadd.f32 %v277, %v414
    %v416 = vpop.f32.mrb[0].mxu0
    %417 = vmatprep.mubr.f32.mxu0 0.0
    %418 = vmatmul.mubr.f32.gmra.mrb[0].mxu0 %v296
    %v419 = vpop.f32.mrb[0].mxu0
    %v420 = vadd.f32 %v277, %v419
    %v421 = vpop.f32.mrb[0].mxu0
    %422 = vmatprep.mubr.f32.mxu0 0.0
    %423 = vmatmul.mubr.f32.gmra.mrb[0].mxu0 %v299
    %v424 = vpop.f32.mrb[0].mxu0
    %v425 = vadd.f32 %v277, %v424
    %v426 = vpop.f32.mrb[0].mxu0
    %427 = vmatprep.mubr.f32.mxu0 0.0
    %428 = vmatmul.mubr.f32.gmra.mrb[0].mxu0 %v302
    %v429 = vpop.f32.mrb[0].mxu0
    %v430 = vadd.f32 %v277, %v429
    %v431 = vpop.f32.mrb[0].mxu0
    %432 = vmatprep.mubr.f32.mxu0 0.0
    %433 = vmatmul.mubr.f32.gmra.mrb[0].mxu0 %v305
    %v434 = vpop.f32.mrb[0].mxu0
    %v435 = vadd.f32 %v277, %v434
    %v436 = vpop.f32.mrb[0].mxu0
    %437 = vmatprep.mubr.f32.mxu0 0.0
    %438 = vmatmul.mubr.f32.gmra.mrb[0].mxu0 %v308
    %v439 = vpop.f32.mrb[0].mxu0
    %v440 = vadd.f32 %v277, %v439
    %v441 = vpop.f32.mrb[0].mxu0
    %442 = vmatprep.mubr.f32.mxu0 0.0
    %443 = vmatmul.mubr.f32.gmra.mrb[0].mxu0 %v311
    %v444 = vpop.f32.mrb[0].mxu0
    %v445 = vadd.f32 %v277, %v444
    %v446 = vpop.f32.mrb[0].mxu0
    %447 = vmatprep.mubr.f32.mxu0 0.0
    %448 = vmatmul.mubr.f32.gmra.mrb[0].mxu0 %v314
    %v449 = vpop.f32.mrb[0].mxu0
    %v450 = vadd.f32 %v277, %v449
    %v451 = vpop.f32.mrb[0].mxu0
    %452 = vmatprep.mubr.f32.mxu0 0.0
    %453 = vmatmul.mubr.f32.gmra.mrb[0].mxu0 %v317
    %v454 = vpop.f32.mrb[0].mxu0
    %v455 = vadd.f32 %v277, %v454
    %v456 = vpop.f32.mrb[0].mxu0
    %457 = vmatprep.mubr.f32.mxu0 0.0
    %458 = vmatmul.mubr.f32.gmra.mrb[0].mxu0 %v320
    %v459 = vpop.f32.mrb[0].mxu0
    %v460 = vadd.f32 %v277, %v459
    %v461 = vpop.f32.mrb[0].mxu0
    %462 = vmatprep.mubr.f32.mxu0 0.0
    %463 = vmatmul.mubr.f32.gmra.mrb[0].mxu0 %v323
    %v464 = vpop.f32.mrb[0].mxu0
    %v465 = vadd.f32 %v277, %v464
    %v466 = vpop.f32.mrb[0].mxu0
    %467 = vmatprep.mubr.f32.mxu0 0.0
    %468 = vmatmul.mubr.f32.gmra.mrb[0].mxu0 %v326
    %v469 = vpop.f32.mrb[0].mxu0
    %v470 = vadd.f32 %v277, %v469
    %v471 = vpop.f32.mrb[0].mxu0
    %472 = vdwg.mxu0
    %v473 = vmax.f32 %v395, 0.0
    %v474 = vmax.f32 %v400, 0.0
    %v475 = vmax.f32 %v405, 0.0
    %v476 = vmax.f32 %v410, 0.0
    %v477 = vmax.f32 %v415, 0.0
    %v478 = vmax.f32 %v420, 0.0
    %v479 = vmax.f32 %v425, 0.0
    %v480 = vmax.f32 %v430, 0.0
    %v481 = vmax.f32 %v435, 0.0
    %v482 = vmax.f32 %v440, 0.0
    %v483 = vmax.f32 %v445, 0.0
    %v484 = vmax.f32 %v450, 0.0
    %v485 = vmax.f32 %v455, 0.0
    %v486 = vmax.f32 %v460, 0.0
    %v487 = vmax.f32 %v465, 0.0
    %v488 = vmax.f32 %v470, 0.0
    %v489 = vld [vmem:[%s5] sm:$0x1]
    %v491 = vlaneseq
    %v492 = vshrl.u32 %v491, 7
    %v493 = vsub.s32 0, %v492
    %v494 = vrot.slane %v489, %v493
    %v496 = vmul.f32 %v473, %v494
    %v497 = vmul.f32 %v474, %v494
    %v498 = vmul.f32 %v475, %v494
    %v499 = vmul.f32 %v476, %v494
    %v500 = vmul.f32 %v477, %v494
    %v501 = vmul.f32 %v478, %v494
    %v502 = vmul.f32 %v479, %v494
    %v503 = vmul.f32 %v480, %v494
    %v504 = vmul.f32 %v481, %v494
    %v505 = vmul.f32 %v482, %v494
    %v506 = vmul.f32 %v483, %v494
    %v507 = vmul.f32 %v484, %v494
    %v508 = vmul.f32 %v485, %v494
    %v509 = vmul.f32 %v486, %v494
    %v510 = vmul.f32 %v487, %v494
    %v511 = vmul.f32 %v488, %v494
    %v512 = vsel %vm279, %v496, 0.0
    %513 = vadd.xlane.f32.xlu0 %v512
    %v514 = vpop.xlane.xlu0 %513
    %v515 = vsel %vm279, %v497, 0.0
    %516 = vadd.xlane.f32.xlu0 %v515
    %v517 = vpop.xlane.xlu0 %516
    %v518 = vsel %vm279, %v498, 0.0
    %519 = vadd.xlane.f32.xlu0 %v518
    %v520 = vpop.xlane.xlu0 %519
    %v521 = vsel %vm279, %v499, 0.0
    %522 = vadd.xlane.f32.xlu0 %v521
    %v523 = vpop.xlane.xlu0 %522
    %v524 = vsel %vm279, %v500, 0.0
    %525 = vadd.xlane.f32.xlu0 %v524
    %v526 = vpop.xlane.xlu0 %525
    %v527 = vsel %vm279, %v501, 0.0
    %528 = vadd.xlane.f32.xlu0 %v527
    %v529 = vpop.xlane.xlu0 %528
    %v530 = vsel %vm279, %v502, 0.0
    %531 = vadd.xlane.f32.xlu0 %v530
    %v532 = vpop.xlane.xlu0 %531
    %v533 = vsel %vm279, %v503, 0.0
    %534 = vadd.xlane.f32.xlu0 %v533
    %v535 = vpop.xlane.xlu0 %534
    %v536 = vsel %vm279, %v504, 0.0
    %537 = vadd.xlane.f32.xlu0 %v536
    %v538 = vpop.xlane.xlu0 %537
    %v539 = vsel %vm279, %v505, 0.0
    %540 = vadd.xlane.f32.xlu0 %v539
    %v541 = vpop.xlane.xlu0 %540
    %v542 = vsel %vm279, %v506, 0.0
    %543 = vadd.xlane.f32.xlu0 %v542
    %v544 = vpop.xlane.xlu0 %543
    %v545 = vsel %vm279, %v507, 0.0
    %546 = vadd.xlane.f32.xlu0 %v545
    %v547 = vpop.xlane.xlu0 %546
    %v548 = vsel %vm279, %v508, 0.0
    %549 = vadd.xlane.f32.xlu0 %v548
    %v550 = vpop.xlane.xlu0 %549
    %v551 = vsel %vm279, %v509, 0.0
    %552 = vadd.xlane.f32.xlu0 %v551
    %v553 = vpop.xlane.xlu0 %552
    %v554 = vsel %vm279, %v510, 0.0
    %555 = vadd.xlane.f32.xlu0 %v554
    %v556 = vpop.xlane.xlu0 %555
    %v557 = vsel %vm279, %v511, 0.0
    %558 = vadd.xlane.f32.xlu0 %v557
    %v559 = vpop.xlane.xlu0 %558
    %s560 = sld [smem:[#allocation2]]
    %v561 = vstv %s560
    %v562 = vadd.f32 %v514, %v561
    %v563 = vadd.f32 %v517, %v561
    %v564 = vadd.f32 %v520, %v561
    %v565 = vadd.f32 %v523, %v561
    %v566 = vadd.f32 %v526, %v561
    %v567 = vadd.f32 %v529, %v561
    %v568 = vadd.f32 %v532, %v561
    %v569 = vadd.f32 %v535, %v561
    %v570 = vadd.f32 %v538, %v561
    %v571 = vadd.f32 %v541, %v561
    %v572 = vadd.f32 %v544, %v561
    %v573 = vadd.f32 %v547, %v561
    %v574 = vadd.f32 %v550, %v561
    %v575 = vadd.f32 %v553, %v561
    %v576 = vadd.f32 %v556, %v561
    %v577 = vadd.f32 %v559, %v561
    %v594 = vlaneseq
    %v595 = vand.u32 %v594, 127
    %v596 = vlaneseq
    %v597 = vshrl.u32 %v596, 7
    %v598 = vsub.s32 %v595, %v597
    %v599 = vrot.slane %v562, %v598
    %v600 = vadd.s32 %v595, 4294967288
    %v601 = vlaneseq
    %v602 = vshrl.u32 %v601, 7
    %v603 = vsub.s32 %v600, %v602
    %v604 = vrot.slane %v563, %v603
    %vm605 = vcmask 130112
    %v606 = vsel %vm605, %v604, %v599
    %v607 = vadd.s32 %v595, 4294967280
    %v608 = vlaneseq
    %v609 = vshrl.u32 %v608, 7
    %v610 = vsub.s32 %v607, %v609
    %v611 = vrot.slane %v564, %v610
    %vm612 = vcmask 195712
    %v613 = vsel %vm612, %v611, %v606
    %v614 = vadd.s32 %v595, 4294967272
    %v615 = vlaneseq
    %v616 = vshrl.u32 %v615, 7
    %v617 = vsub.s32 %v614, %v616
    %v618 = vrot.slane %v565, %v617
    %vm619 = vcmask 261312
    %v620 = vsel %vm619, %v618, %v613
    %v621 = vadd.s32 %v595, 4294967264
    %v622 = vlaneseq
    %v623 = vshrl.u32 %v622, 7
    %v624 = vsub.s32 %v621, %v623
    %v625 = vrot.slane %v566, %v624
    %vm626 = vcmask 326912
    %v627 = vsel %vm626, %v625, %v620
    %v628 = vadd.s32 %v595, 4294967256
    %v629 = vlaneseq
    %v630 = vshrl.u32 %v629, 7
    %v631 = vsub.s32 %v628, %v630
    %v632 = vrot.slane %v567, %v631
    %vm633 = vcmask 392512
    %v634 = vsel %vm633, %v632, %v627
    %v635 = vadd.s32 %v595, 4294967248
    %v636 = vlaneseq
    %v637 = vshrl.u32 %v636, 7
    %v638 = vsub.s32 %v635, %v637
    %v639 = vrot.slane %v568, %v638
    %vm640 = vcmask 458112
    %v641 = vsel %vm640, %v639, %v634
    %v642 = vadd.s32 %v595, 4294967240
    %v643 = vlaneseq
    %v644 = vshrl.u32 %v643, 7
    %v645 = vsub.s32 %v642, %v644
    %v646 = vrot.slane %v569, %v645
    %vm647 = vcmask 523712
    %v648 = vsel %vm647, %v646, %v641
    %v649 = vadd.s32 %v595, 4294967232
    %v650 = vlaneseq
    %v651 = vshrl.u32 %v650, 7
    %v652 = vsub.s32 %v649, %v651
    %v653 = vrot.slane %v570, %v652
    %vm654 = vcmask 589312
    %v655 = vsel %vm654, %v653, %v648
    %v656 = vadd.s32 %v595, 4294967224
    %v657 = vlaneseq
    %v658 = vshrl.u32 %v657, 7
    %v659 = vsub.s32 %v656, %v658
    %v660 = vrot.slane %v571, %v659
    %vm661 = vcmask 654912
    %v662 = vsel %vm661, %v660, %v655
    %v663 = vadd.s32 %v595, 4294967216
    %v664 = vlaneseq
    %v665 = vshrl.u32 %v664, 7
    %v666 = vsub.s32 %v663, %v665
    %v667 = vrot.slane %v572, %v666
    %vm668 = vcmask 720512
    %v669 = vsel %vm668, %v667, %v662
    %v670 = vadd.s32 %v595, 4294967208
    %v671 = vlaneseq
    %v672 = vshrl.u32 %v671, 7
    %v673 = vsub.s32 %v670, %v672
    %v674 = vrot.slane %v573, %v673
    %vm675 = vcmask 786112
    %v676 = vsel %vm675, %v674, %v669
    %v677 = vadd.s32 %v595, 4294967200
    %v678 = vlaneseq
    %v679 = vshrl.u32 %v678, 7
    %v680 = vsub.s32 %v677, %v679
    %v681 = vrot.slane %v574, %v680
    %vm682 = vcmask 851712
    %v683 = vsel %vm682, %v681, %v676
    %v684 = vadd.s32 %v595, 4294967192
    %v685 = vlaneseq
    %v686 = vshrl.u32 %v685, 7
    %v687 = vsub.s32 %v684, %v686
    %v688 = vrot.slane %v575, %v687
    %vm689 = vcmask 917312
    %v690 = vsel %vm689, %v688, %v683
    %v691 = vadd.s32 %v595, 4294967184
    %v692 = vlaneseq
    %v693 = vshrl.u32 %v692, 7
    %v694 = vsub.s32 %v691, %v693
    %v695 = vrot.slane %v576, %v694
    %vm696 = vcmask 982912
    %v697 = vsel %vm696, %v695, %v690
    %v698 = vadd.s32 %v595, 4294967176
    %v699 = vlaneseq
    %v700 = vshrl.u32 %v699, 7
    %v701 = vsub.s32 %v698, %v700
    %v702 = vrot.slane %v577, %v701
    %vm703 = vcmask 1048512
    %v704 = vsel %vm703, %v702, %v697
    %706 = vst [vmem:[#allocation3] sm:$0x1] %v704
    // Predicated region
    $region30: #{tpu_custom_call.1} parent=1 // pred_check
      _
    $region31: #{tpu_custom_call.1} parent=1 // pred_check_branch
      %708 = sbr.rel (0) target = $region33
    $region32: #{tpu_custom_call.1} parent=1 // pred_region
      %s710 = ssub.s32 16, 16
      %711 = vsyncadd [#allocation4], %s710
      %s713 = sshll.u32 [#allocation3], 4
      %s714 = int_to_ptr.vmem [resolvable:$true] %s713
      %716 = dma.vmem_to_hbm [thread:$0]  %s714, 16, %s7, [#allocation4]
    $region33: #{tpu_custom_call.1} parent=1 // pred_fallthru
      _
    // Predicated region
    $region34: #{tpu_custom_call.1} parent=1 // pred_check
      _
    $region35: #{tpu_custom_call.1} parent=1 // pred_check_branch
      %718 = sbr.rel (0) target = $region37
    $region36: #{tpu_custom_call.1} parent=1 // pred_region
      %719 = dma.done [#allocation4], 16
    $region37: #{tpu_custom_call.1} parent=1 // pred_fallthru
      _
    %720 = vsyncpa [#allocation4], 1

// kernel: tpu_custom_call.1
$region0: #{tpu_custom_call.1}
  #allocation0 [shape = 'u32[]', space=smem, size = 0x4, offset = 0x4, fixed_abs, tag = 'smem constant byte address 0x4 - core index']
  #allocation1 [shape = 'u32[144,128]{1,0:T(1,128)}', space=vmem, size = 0x12000, scoped, tag = 'internal scratch']
  #allocation2 [shape = 'f32[1,1]{1,0:T(1,128)S(6)}', space=smem, size = 0x200, scoped, tag = 'scoped memory for tpu_custom_call.1']
  %s0 = inlined_call_operand.vmem [shape: f32[128,17], index: 0, kind: input, shape index: {}]
  %s1 = inlined_call_operand.vmem [shape: f32[17,32], index: 1, kind: input, shape index: {}]
  %s2 = inlined_call_operand.vmem [shape: f32[1,32], index: 2, kind: input, shape index: {}]
  %s3 = inlined_call_operand.vmem [shape: f32[32,32], index: 3, kind: input, shape index: {}]
  %s4 = inlined_call_operand.vmem [shape: f32[1,32], index: 4, kind: input, shape index: {}]
  %s5 = inlined_call_operand.vmem [shape: f32[1,32], index: 5, kind: input, shape index: {}]
  %s6 = inlined_call_operand.<no memory space> [shape: f32[1,1], index: 6, kind: input, shape index: {}]
  %s7 = inlined_call_operand.hbm [shape: f32[1,128], index: 7, kind: output, shape index: {}]
  %s8 = sld [smem:[#allocation0]]
  $region38: #{tpu_custom_call.1} parent=0
    _
  %s10 = ssub.s32 1, %s8
  %s11 = scalar_select 0, %s10, %s8
  %12 = sst [smem:[#allocation2]] %s6
  $region1: #{tpu_custom_call.1} parent=0
    #allocation3 [shape = 'u8[512]{0}', space=vmem, size = 0x400, scoped, tag = 'output window, operand 0, single buffered']
    #allocation4 [shape = 's32[1]{0}', space=sflag, size = 0x4, scoped, tag = 'scoped memory for tpu_custom_call.1']
    %13 = vsyncpa [#allocation4], 0
    // Predicated region
    $region2: #{tpu_custom_call.1} parent=1 // pred_check
      _
    $region3: #{tpu_custom_call.1} parent=1 // pred_check_branch
      %15 = sbr.rel (0) target = $region5
    $region4: #{tpu_custom_call.1} parent=1 // pred_region
      _
    $region5: #{tpu_custom_call.1} parent=1 // pred_fallthru
      _
    // Predicated region
    $region6: #{tpu_custom_call.1} parent=1 // pred_check
      _
    $region7: #{tpu_custom_call.1} parent=1 // pred_check_branch
      %17 = sbr.rel (0) target = $region9
    $region8: #{tpu_custom_call.1} parent=1 // pred_region
      _
    $region9: #{tpu_custom_call.1} parent=1 // pred_fallthru
      _
    // Predicated region
    $region10: #{tpu_custom_call.1} parent=1 // pred_check
      _
    $region11: #{tpu_custom_call.1} parent=1 // pred_check_branch
      %19 = sbr.rel (0) target = $region13
    $region12: #{tpu_custom_call.1} parent=1 // pred_region
      _
    $region13: #{tpu_custom_call.1} parent=1 // pred_fallthru
      _
    // Predicated region
    $region14: #{tpu_custom_call.1} parent=1 // pred_check
      _
    $region15: #{tpu_custom_call.1} parent=1 // pred_check_branch
      %21 = sbr.rel (0) target = $region17
    $region16: #{tpu_custom_call.1} parent=1 // pred_region
      _
    $region17: #{tpu_custom_call.1} parent=1 // pred_fallthru
      _
    // Predicated region
    $region18: #{tpu_custom_call.1} parent=1 // pred_check
      _
    $region19: #{tpu_custom_call.1} parent=1 // pred_check_branch
      %23 = sbr.rel (0) target = $region21
    $region20: #{tpu_custom_call.1} parent=1 // pred_region
      _
    $region21: #{tpu_custom_call.1} parent=1 // pred_fallthru
      _
    // Predicated region
    $region22: #{tpu_custom_call.1} parent=1 // pred_check
      _
    $region23: #{tpu_custom_call.1} parent=1 // pred_check_branch
      %25 = sbr.rel (0) target = $region25
    $region24: #{tpu_custom_call.1} parent=1 // pred_region
      _
    $region25: #{tpu_custom_call.1} parent=1 // pred_fallthru
      _
    // Predicated region
    $region26: #{tpu_custom_call.1} parent=1 // pred_check
      _
    $region27: #{tpu_custom_call.1} parent=1 // pred_check_branch
      %27 = sbr.rel (0) target = $region29
    $region28: #{tpu_custom_call.1} parent=1 // pred_region
      _
    $region29: #{tpu_custom_call.1} parent=1 // pred_fallthru
      _
    %v28 = vld [vmem:[%s0] sm:$0xff]
    %v29 = vld [vmem:[%s0 + $0x8] sm:$0xff]
    %v30 = vld [vmem:[%s0 + $0x10] sm:$0xff]
    %v31 = vld [vmem:[%s0 + $0x18] sm:$0xff]
    %v32 = vld [vmem:[%s0 + $0x20] sm:$0xff]
    %v33 = vld [vmem:[%s0 + $0x28] sm:$0xff]
    %v34 = vld [vmem:[%s0 + $0x30] sm:$0xff]
    %v35 = vld [vmem:[%s0 + $0x38] sm:$0xff]
    %v36 = vld [vmem:[%s0 + $0x40] sm:$0xff]
    %v37 = vld [vmem:[%s0 + $0x48] sm:$0xff]
    %v38 = vld [vmem:[%s0 + $0x50] sm:$0xff]
    %v39 = vld [vmem:[%s0 + $0x58] sm:$0xff]
    %v40 = vld [vmem:[%s0 + $0x60] sm:$0xff]
    %v41 = vld [vmem:[%s0 + $0x68] sm:$0xff]
    %v42 = vld [vmem:[%s0 + $0x70] sm:$0xff]
    %v43 = vld [vmem:[%s0 + $0x78] sm:$0xff]
    %v44 = vld [vmem:[%s1] sm:$0xff]
    %v45 = vld [vmem:[%s1 + $0x8] sm:$0xff]
    %v46 = vld [vmem:[%s1 + $0x10] sm:$0x1]
    %v47 = vld [vmem:[%s2] sm:$0x1]
    %v49 = vlaneseq
    %v50 = vshrl.u32 %v49, 7
    %v51 = vsub.s32 0, %v50
    %v52 = vrot.slane %v47, %v51
    %vm54 = vcmask 138240
    %v56 = vsel %vm54, %v28, 0
    %v59 = vsel %vm54, %v29, 0
    %v62 = vsel %vm54, %v30, 0
    %v65 = vsel %vm54, %v31, 0
    %v68 = vsel %vm54, %v32, 0
    %v71 = vsel %vm54, %v33, 0
    %v74 = vsel %vm54, %v34, 0
    %v77 = vsel %vm54, %v35, 0
    %v80 = vsel %vm54, %v36, 0
    %v83 = vsel %vm54, %v37, 0
    %v86 = vsel %vm54, %v38, 0
    %v89 = vsel %vm54, %v39, 0
    %v92 = vsel %vm54, %v40, 0
    %v95 = vsel %vm54, %v41, 0
    %v98 = vsel %vm54, %v42, 0
    %v101 = vsel %vm54, %v43, 0
    %vm103 = vcmask 1040384
    %v105 = vsel %vm103, %v46, 0
    %107 = vmatprep.subr.mxu0 0.0
    %108 = vmatpush1.msra.mxu0 %v44
    %109 = vmatprep.subr.mxu0 0.0
    %110 = vmatpush1.msra.mxu0 %v45
    %111 = vmatprep.subr.mxu0 0.0
    %112 = vmatpush1.msra.mxu0 %v105
    %113 = vmatprep.subr.mxu0 0.0
    %114 = vmatpush1.msra.mxu0 0.0
    %115 = vmatprep.subr.mxu0 0.0
    %116 = vmatpush1.msra.mxu0 0.0
    %117 = vmatprep.subr.mxu0 0.0
    %118 = vmatpush1.msra.mxu0 0.0
    %119 = vmatprep.subr.mxu0 0.0
    %120 = vmatpush1.msra.mxu0 0.0
    %121 = vmatprep.subr.mxu0 0.0
    %122 = vmatpush1.msra.mxu0 0.0
    %123 = vmatprep.subr.mxu0 0.0
    %124 = vmatpush1.msra.mxu0 0.0
    %125 = vmatprep.subr.mxu0 0.0
    %126 = vmatpush1.msra.mxu0 0.0
    %127 = vmatprep.subr.mxu0 0.0
    %128 = vmatpush1.msra.mxu0 0.0
    %129 = vmatprep.subr.mxu0 0.0
    %130 = vmatpush1.msra.mxu0 0.0
    %131 = vmatprep.subr.mxu0 0.0
    %132 = vmatpush1.msra.mxu0 0.0
    %133 = vmatprep.subr.mxu0 0.0
    %134 = vmatpush1.msra.mxu0 0.0
    %135 = vmatprep.subr.mxu0 0.0
    %136 = vmatpush1.msra.mxu0 0.0
    %137 = vmatprep.subr.mxu0 0.0
    %138 = vmatpush1.msra.mxu0 0.0
    %139 = vmatprep.subr.mxu0 0.0
    %140 = vmatpush1.msra.mxu0 0.0
    %141 = vmatprep.subr.mxu0 0.0
    %142 = vmatpush1.msra.mxu0 0.0
    %143 = vmatprep.subr.mxu0 0.0
    %144 = vmatpush1.msra.mxu0 0.0
    %145 = vmatprep.subr.mxu0 0.0
    %146 = vmatpush1.msra.mxu0 0.0
    %147 = vmatprep.subr.mxu0 0.0
    %148 = vmatpush1.msra.mxu0 0.0
    %149 = vmatprep.subr.mxu0 0.0
    %150 = vmatpush1.msra.mxu0 0.0
    %151 = vmatprep.subr.mxu0 0.0
    %152 = vmatpush1.msra.mxu0 0.0
    %153 = vmatprep.subr.mxu0 0.0
    %154 = vmatpush1.msra.mxu0 0.0
    %155 = vmatprep.subr.mxu0 0.0
    %156 = vmatpush1.msra.mxu0 0.0
    %157 = vmatprep.subr.mxu0 0.0
    %158 = vmatpush1.msra.mxu0 0.0
    %159 = vmatprep.subr.mxu0 0.0
    %160 = vmatpush1.msra.mxu0 0.0
    %161 = vmatprep.subr.mxu0 0.0
    %162 = vmatpush1.msra.mxu0 0.0
    %163 = vmatprep.subr.mxu0 0.0
    %164 = vmatpush1.msra.mxu0 0.0
    %165 = vmatprep.subr.mxu0 0.0
    %166 = vmatpush1.msra.mxu0 0.0
    %167 = vmatprep.subr.mxu0 0.0
    %168 = vmatpush1.msra.mxu0 0.0
    %169 = vmatprep.subr.mxu0 0.0
    %170 = vmatpush1.msra.mxu0 0.0
    %171 = vmatprep.mubr.f32.mxu0 0.0
    %172 = vmatmul.mubr.f32.gmra.mrb[0].mxu0 %v56
    %v173 = vpop.f32.mrb[0].mxu0
    %v174 = vadd.f32 %v52, %v173
    %v175 = vpop.f32.mrb[0].mxu0
    %176 = vmatprep.mubr.f32.mxu0 0.0
    %177 = vmatmul.mubr.f32.gmra.mrb[0].mxu0 %v59
    %v178 = vpop.f32.mrb[0].mxu0
    %v179 = vadd.f32 %v52, %v178
    %v180 = vpop.f32.mrb[0].mxu0
    %181 = vmatprep.mubr.f32.mxu0 0.0
    %182 = vmatmul.mubr.f32.gmra.mrb[0].mxu0 %v62
    %v183 = vpop.f32.mrb[0].mxu0
    %v184 = vadd.f32 %v52, %v183
    %v185 = vpop.f32.mrb[0].mxu0
    %186 = vmatprep.mubr.f32.mxu0 0.0
    %187 = vmatmul.mubr.f32.gmra.mrb[0].mxu0 %v65
    %v188 = vpop.f32.mrb[0].mxu0
    %v189 = vadd.f32 %v52, %v188
    %v190 = vpop.f32.mrb[0].mxu0
    %191 = vmatprep.mubr.f32.mxu0 0.0
    %192 = vmatmul.mubr.f32.gmra.mrb[0].mxu0 %v68
    %v193 = vpop.f32.mrb[0].mxu0
    %v194 = vadd.f32 %v52, %v193
    %v195 = vpop.f32.mrb[0].mxu0
    %196 = vmatprep.mubr.f32.mxu0 0.0
    %197 = vmatmul.mubr.f32.gmra.mrb[0].mxu0 %v71
    %v198 = vpop.f32.mrb[0].mxu0
    %v199 = vadd.f32 %v52, %v198
    %v200 = vpop.f32.mrb[0].mxu0
    %201 = vmatprep.mubr.f32.mxu0 0.0
    %202 = vmatmul.mubr.f32.gmra.mrb[0].mxu0 %v74
    %v203 = vpop.f32.mrb[0].mxu0
    %v204 = vadd.f32 %v52, %v203
    %v205 = vpop.f32.mrb[0].mxu0
    %206 = vmatprep.mubr.f32.mxu0 0.0
    %207 = vmatmul.mubr.f32.gmra.mrb[0].mxu0 %v77
    %v208 = vpop.f32.mrb[0].mxu0
    %v209 = vadd.f32 %v52, %v208
    %v210 = vpop.f32.mrb[0].mxu0
    %211 = vmatprep.mubr.f32.mxu0 0.0
    %212 = vmatmul.mubr.f32.gmra.mrb[0].mxu0 %v80
    %v213 = vpop.f32.mrb[0].mxu0
    %v214 = vadd.f32 %v52, %v213
    %v215 = vpop.f32.mrb[0].mxu0
    %216 = vmatprep.mubr.f32.mxu0 0.0
    %217 = vmatmul.mubr.f32.gmra.mrb[0].mxu0 %v83
    %v218 = vpop.f32.mrb[0].mxu0
    %v219 = vadd.f32 %v52, %v218
    %v220 = vpop.f32.mrb[0].mxu0
    %221 = vmatprep.mubr.f32.mxu0 0.0
    %222 = vmatmul.mubr.f32.gmra.mrb[0].mxu0 %v86
    %v223 = vpop.f32.mrb[0].mxu0
    %v224 = vadd.f32 %v52, %v223
    %v225 = vpop.f32.mrb[0].mxu0
    %226 = vmatprep.mubr.f32.mxu0 0.0
    %227 = vmatmul.mubr.f32.gmra.mrb[0].mxu0 %v89
    %v228 = vpop.f32.mrb[0].mxu0
    %v229 = vadd.f32 %v52, %v228
    %v230 = vpop.f32.mrb[0].mxu0
    %231 = vmatprep.mubr.f32.mxu0 0.0
    %232 = vmatmul.mubr.f32.gmra.mrb[0].mxu0 %v92
    %v233 = vpop.f32.mrb[0].mxu0
    %v234 = vadd.f32 %v52, %v233
    %v235 = vpop.f32.mrb[0].mxu0
    %236 = vmatprep.mubr.f32.mxu0 0.0
    %237 = vmatmul.mubr.f32.gmra.mrb[0].mxu0 %v95
    %v238 = vpop.f32.mrb[0].mxu0
    %v239 = vadd.f32 %v52, %v238
    %v240 = vpop.f32.mrb[0].mxu0
    %241 = vmatprep.mubr.f32.mxu0 0.0
    %242 = vmatmul.mubr.f32.gmra.mrb[0].mxu0 %v98
    %v243 = vpop.f32.mrb[0].mxu0
    %v244 = vadd.f32 %v52, %v243
    %v245 = vpop.f32.mrb[0].mxu0
    %246 = vmatprep.mubr.f32.mxu0 0.0
    %247 = vmatmul.mubr.f32.gmra.mrb[0].mxu0 %v101
    %v248 = vpop.f32.mrb[0].mxu0
    %v249 = vadd.f32 %v52, %v248
    %v250 = vpop.f32.mrb[0].mxu0
    %251 = vdwg.mxu0
    %v252 = vmax.f32 %v174, 0.0
    %v253 = vmax.f32 %v179, 0.0
    %v254 = vmax.f32 %v184, 0.0
    %v255 = vmax.f32 %v189, 0.0
    %v256 = vmax.f32 %v194, 0.0
    %v257 = vmax.f32 %v199, 0.0
    %v258 = vmax.f32 %v204, 0.0
    %v259 = vmax.f32 %v209, 0.0
    %v260 = vmax.f32 %v214, 0.0
    %v261 = vmax.f32 %v219, 0.0
    %v262 = vmax.f32 %v224, 0.0
    %v263 = vmax.f32 %v229, 0.0
    %v264 = vmax.f32 %v234, 0.0
    %v265 = vmax.f32 %v239, 0.0
    %v266 = vmax.f32 %v244, 0.0
    %v267 = vmax.f32 %v249, 0.0
    %v268 = vld [vmem:[%s3] sm:$0xff]
    %v269 = vld [vmem:[%s3 + $0x8] sm:$0xff]
    %v270 = vld [vmem:[%s3 + $0x10] sm:$0xff]
    %v271 = vld [vmem:[%s3 + $0x18] sm:$0xff]
    %v272 = vld [vmem:[%s4] sm:$0x1]
    %v274 = vlaneseq
    %v275 = vshrl.u32 %v274, 7
    %v276 = vsub.s32 0, %v275
    %v277 = vrot.slane %v272, %v276
    %vm279 = vcmask 261120
    %v281 = vsel %vm279, %v252, 0
    %v284 = vsel %vm279, %v253, 0
    %v287 = vsel %vm279, %v254, 0
    %v290 = vsel %vm279, %v255, 0
    %v293 = vsel %vm279, %v256, 0
    %v296 = vsel %vm279, %v257, 0
    %v299 = vsel %vm279, %v258, 0
    %v302 = vsel %vm279, %v259, 0
    %v305 = vsel %vm279, %v260, 0
    %v308 = vsel %vm279, %v261, 0
    %v311 = vsel %vm279, %v262, 0
    %v314 = vsel %vm279, %v263, 0
    %v317 = vsel %vm279, %v264, 0
    %v320 = vsel %vm279, %v265, 0
    %v323 = vsel %vm279, %v266, 0
    %v326 = vsel %vm279, %v267, 0
    %328 = vmatprep.subr.mxu0 0.0
    %329 = vmatpush1.msra.mxu0 %v268
    %330 = vmatprep.subr.mxu0 0.0
    %331 = vmatpush1.msra.mxu0 %v269
    %332 = vmatprep.subr.mxu0 0.0
    %333 = vmatpush1.msra.mxu0 %v270
    %334 = vmatprep.subr.mxu0 0.0
    %335 = vmatpush1.msra.mxu0 %v271
    %336 = vmatprep.subr.mxu0 0.0
    %337 = vmatpush1.msra.mxu0 0.0
    %338 = vmatprep.subr.mxu0 0.0
    %339 = vmatpush1.msra.mxu0 0.0
    %340 = vmatprep.subr.mxu0 0.0
    %341 = vmatpush1.msra.mxu0 0.0
    %342 = vmatprep.subr.mxu0 0.0
    %343 = vmatpush1.msra.mxu0 0.0
    %344 = vmatprep.subr.mxu0 0.0
    %345 = vmatpush1.msra.mxu0 0.0
    %346 = vmatprep.subr.mxu0 0.0
    %347 = vmatpush1.msra.mxu0 0.0
    %348 = vmatprep.subr.mxu0 0.0
    %349 = vmatpush1.msra.mxu0 0.0
    %350 = vmatprep.subr.mxu0 0.0
    %351 = vmatpush1.msra.mxu0 0.0
    %352 = vmatprep.subr.mxu0 0.0
    %353 = vmatpush1.msra.mxu0 0.0
    %354 = vmatprep.subr.mxu0 0.0
    %355 = vmatpush1.msra.mxu0 0.0
    %356 = vmatprep.subr.mxu0 0.0
    %357 = vmatpush1.msra.mxu0 0.0
    %358 = vmatprep.subr.mxu0 0.0
    %359 = vmatpush1.msra.mxu0 0.0
    %360 = vmatprep.subr.mxu0 0.0
    %361 = vmatpush1.msra.mxu0 0.0
    %362 = vmatprep.subr.mxu0 0.0
    %363 = vmatpush1.msra.mxu0 0.0
    %364 = vmatprep.subr.mxu0 0.0
    %365 = vmatpush1.msra.mxu0 0.0
    %366 = vmatprep.subr.mxu0 0.0
    %367 = vmatpush1.msra.mxu0 0.0
    %368 = vmatprep.subr.mxu0 0.0
    %369 = vmatpush1.msra.mxu0 0.0
    %370 = vmatprep.subr.mxu0 0.0
    %371 = vmatpush1.msra.mxu0 0.0
    %372 = vmatprep.subr.mxu0 0.0
    %373 = vmatpush1.msra.mxu0 0.0
    %374 = vmatprep.subr.mxu0 0.0
    %375 = vmatpush1.msra.mxu0 0.0
    %376 = vmatprep.subr.mxu0 0.0
    %377 = vmatpush1.msra.mxu0 0.0
    %378 = vmatprep.subr.mxu0 0.0
    %379 = vmatpush1.msra.mxu0 0.0
    %380 = vmatprep.subr.mxu0 0.0
    %381 = vmatpush1.msra.mxu0 0.0
    %382 = vmatprep.subr.mxu0 0.0
    %383 = vmatpush1.msra.mxu0 0.0
    %384 = vmatprep.subr.mxu0 0.0
    %385 = vmatpush1.msra.mxu0 0.0
    %386 = vmatprep.subr.mxu0 0.0
    %387 = vmatpush1.msra.mxu0 0.0
    %388 = vmatprep.subr.mxu0 0.0
    %389 = vmatpush1.msra.mxu0 0.0
    %390 = vmatprep.subr.mxu0 0.0
    %391 = vmatpush1.msra.mxu0 0.0
    %392 = vmatprep.mubr.f32.mxu0 0.0
    %393 = vmatmul.mubr.f32.gmra.mrb[0].mxu0 %v281
    %v394 = vpop.f32.mrb[0].mxu0
    %v395 = vadd.f32 %v277, %v394
    %v396 = vpop.f32.mrb[0].mxu0
    %397 = vmatprep.mubr.f32.mxu0 0.0
    %398 = vmatmul.mubr.f32.gmra.mrb[0].mxu0 %v284
    %v399 = vpop.f32.mrb[0].mxu0
    %v400 = vadd.f32 %v277, %v399
    %v401 = vpop.f32.mrb[0].mxu0
    %402 = vmatprep.mubr.f32.mxu0 0.0
    %403 = vmatmul.mubr.f32.gmra.mrb[0].mxu0 %v287
    %v404 = vpop.f32.mrb[0].mxu0
    %v405 = vadd.f32 %v277, %v404
    %v406 = vpop.f32.mrb[0].mxu0
    %407 = vmatprep.mubr.f32.mxu0 0.0
    %408 = vmatmul.mubr.f32.gmra.mrb[0].mxu0 %v290
    %v409 = vpop.f32.mrb[0].mxu0
    %v410 = vadd.f32 %v277, %v409
    %v411 = vpop.f32.mrb[0].mxu0
    %412 = vmatprep.mubr.f32.mxu0 0.0
    %413 = vmatmul.mubr.f32.gmra.mrb[0].mxu0 %v293
    %v414 = vpop.f32.mrb[0].mxu0
    %v415 = vadd.f32 %v277, %v414
    %v416 = vpop.f32.mrb[0].mxu0
    %417 = vmatprep.mubr.f32.mxu0 0.0
    %418 = vmatmul.mubr.f32.gmra.mrb[0].mxu0 %v296
    %v419 = vpop.f32.mrb[0].mxu0
    %v420 = vadd.f32 %v277, %v419
    %v421 = vpop.f32.mrb[0].mxu0
    %422 = vmatprep.mubr.f32.mxu0 0.0
    %423 = vmatmul.mubr.f32.gmra.mrb[0].mxu0 %v299
    %v424 = vpop.f32.mrb[0].mxu0
    %v425 = vadd.f32 %v277, %v424
    %v426 = vpop.f32.mrb[0].mxu0
    %427 = vmatprep.mubr.f32.mxu0 0.0
    %428 = vmatmul.mubr.f32.gmra.mrb[0].mxu0 %v302
    %v429 = vpop.f32.mrb[0].mxu0
    %v430 = vadd.f32 %v277, %v429
    %v431 = vpop.f32.mrb[0].mxu0
    %432 = vmatprep.mubr.f32.mxu0 0.0
    %433 = vmatmul.mubr.f32.gmra.mrb[0].mxu0 %v305
    %v434 = vpop.f32.mrb[0].mxu0
    %v435 = vadd.f32 %v277, %v434
    %v436 = vpop.f32.mrb[0].mxu0
    %437 = vmatprep.mubr.f32.mxu0 0.0
    %438 = vmatmul.mubr.f32.gmra.mrb[0].mxu0 %v308
    %v439 = vpop.f32.mrb[0].mxu0
    %v440 = vadd.f32 %v277, %v439
    %v441 = vpop.f32.mrb[0].mxu0
    %442 = vmatprep.mubr.f32.mxu0 0.0
    %443 = vmatmul.mubr.f32.gmra.mrb[0].mxu0 %v311
    %v444 = vpop.f32.mrb[0].mxu0
    %v445 = vadd.f32 %v277, %v444
    %v446 = vpop.f32.mrb[0].mxu0
    %447 = vmatprep.mubr.f32.mxu0 0.0
    %448 = vmatmul.mubr.f32.gmra.mrb[0].mxu0 %v314
    %v449 = vpop.f32.mrb[0].mxu0
    %v450 = vadd.f32 %v277, %v449
    %v451 = vpop.f32.mrb[0].mxu0
    %452 = vmatprep.mubr.f32.mxu0 0.0
    %453 = vmatmul.mubr.f32.gmra.mrb[0].mxu0 %v317
    %v454 = vpop.f32.mrb[0].mxu0
    %v455 = vadd.f32 %v277, %v454
    %v456 = vpop.f32.mrb[0].mxu0
    %457 = vmatprep.mubr.f32.mxu0 0.0
    %458 = vmatmul.mubr.f32.gmra.mrb[0].mxu0 %v320
    %v459 = vpop.f32.mrb[0].mxu0
    %v460 = vadd.f32 %v277, %v459
    %v461 = vpop.f32.mrb[0].mxu0
    %462 = vmatprep.mubr.f32.mxu0 0.0
    %463 = vmatmul.mubr.f32.gmra.mrb[0].mxu0 %v323
    %v464 = vpop.f32.mrb[0].mxu0
    %v465 = vadd.f32 %v277, %v464
    %v466 = vpop.f32.mrb[0].mxu0
    %467 = vmatprep.mubr.f32.mxu0 0.0
    %468 = vmatmul.mubr.f32.gmra.mrb[0].mxu0 %v326
    %v469 = vpop.f32.mrb[0].mxu0
    %v470 = vadd.f32 %v277, %v469
    %v471 = vpop.f32.mrb[0].mxu0
    %472 = vdwg.mxu0
    %v473 = vmax.f32 %v395, 0.0
    %v474 = vmax.f32 %v400, 0.0
    %v475 = vmax.f32 %v405, 0.0
    %v476 = vmax.f32 %v410, 0.0
    %v477 = vmax.f32 %v415, 0.0
    %v478 = vmax.f32 %v420, 0.0
    %v479 = vmax.f32 %v425, 0.0
    %v480 = vmax.f32 %v430, 0.0
    %v481 = vmax.f32 %v435, 0.0
    %v482 = vmax.f32 %v440, 0.0
    %v483 = vmax.f32 %v445, 0.0
    %v484 = vmax.f32 %v450, 0.0
    %v485 = vmax.f32 %v455, 0.0
    %v486 = vmax.f32 %v460, 0.0
    %v487 = vmax.f32 %v465, 0.0
    %v488 = vmax.f32 %v470, 0.0
    %v489 = vld [vmem:[%s5] sm:$0x1]
    %v491 = vlaneseq
    %v492 = vshrl.u32 %v491, 7
    %v493 = vsub.s32 0, %v492
    %v494 = vrot.slane %v489, %v493
    %v496 = vmul.f32 %v473, %v494
    %v497 = vmul.f32 %v474, %v494
    %v498 = vmul.f32 %v475, %v494
    %v499 = vmul.f32 %v476, %v494
    %v500 = vmul.f32 %v477, %v494
    %v501 = vmul.f32 %v478, %v494
    %v502 = vmul.f32 %v479, %v494
    %v503 = vmul.f32 %v480, %v494
    %v504 = vmul.f32 %v481, %v494
    %v505 = vmul.f32 %v482, %v494
    %v506 = vmul.f32 %v483, %v494
    %v507 = vmul.f32 %v484, %v494
    %v508 = vmul.f32 %v485, %v494
    %v509 = vmul.f32 %v486, %v494
    %v510 = vmul.f32 %v487, %v494
    %v511 = vmul.f32 %v488, %v494
    %v512 = vsel %vm279, %v496, 0.0
    %513 = vadd.xlane.f32.xlu0 %v512
    %v514 = vpop.xlane.xlu0 %513
    %v515 = vsel %vm279, %v497, 0.0
    %516 = vadd.xlane.f32.xlu0 %v515
    %v517 = vpop.xlane.xlu0 %516
    %v518 = vsel %vm279, %v498, 0.0
    %519 = vadd.xlane.f32.xlu0 %v518
    %v520 = vpop.xlane.xlu0 %519
    %v521 = vsel %vm279, %v499, 0.0
    %522 = vadd.xlane.f32.xlu0 %v521
    %v523 = vpop.xlane.xlu0 %522
    %v524 = vsel %vm279, %v500, 0.0
    %525 = vadd.xlane.f32.xlu0 %v524
    %v526 = vpop.xlane.xlu0 %525
    %v527 = vsel %vm279, %v501, 0.0
    %528 = vadd.xlane.f32.xlu0 %v527
    %v529 = vpop.xlane.xlu0 %528
    %v530 = vsel %vm279, %v502, 0.0
    %531 = vadd.xlane.f32.xlu0 %v530
    %v532 = vpop.xlane.xlu0 %531
    %v533 = vsel %vm279, %v503, 0.0
    %534 = vadd.xlane.f32.xlu0 %v533
    %v535 = vpop.xlane.xlu0 %534
    %v536 = vsel %vm279, %v504, 0.0
    %537 = vadd.xlane.f32.xlu0 %v536
    %v538 = vpop.xlane.xlu0 %537
    %v539 = vsel %vm279, %v505, 0.0
    %540 = vadd.xlane.f32.xlu0 %v539
    %v541 = vpop.xlane.xlu0 %540
    %v542 = vsel %vm279, %v506, 0.0
    %543 = vadd.xlane.f32.xlu0 %v542
    %v544 = vpop.xlane.xlu0 %543
    %v545 = vsel %vm279, %v507, 0.0
    %546 = vadd.xlane.f32.xlu0 %v545
    %v547 = vpop.xlane.xlu0 %546
    %v548 = vsel %vm279, %v508, 0.0
    %549 = vadd.xlane.f32.xlu0 %v548
    %v550 = vpop.xlane.xlu0 %549
    %v551 = vsel %vm279, %v509, 0.0
    %552 = vadd.xlane.f32.xlu0 %v551
    %v553 = vpop.xlane.xlu0 %552
    %v554 = vsel %vm279, %v510, 0.0
    %555 = vadd.xlane.f32.xlu0 %v554
    %v556 = vpop.xlane.xlu0 %555
    %v557 = vsel %vm279, %v511, 0.0
    %558 = vadd.xlane.f32.xlu0 %v557
    %v559 = vpop.xlane.xlu0 %558
    %s560 = sld [smem:[#allocation2]]
    %v561 = vstv %s560
    %v562 = vadd.f32 %v514, %v561
    %v563 = vadd.f32 %v517, %v561
    %v564 = vadd.f32 %v520, %v561
    %v565 = vadd.f32 %v523, %v561
    %v566 = vadd.f32 %v526, %v561
    %v567 = vadd.f32 %v529, %v561
    %v568 = vadd.f32 %v532, %v561
    %v569 = vadd.f32 %v535, %v561
    %v570 = vadd.f32 %v538, %v561
    %v571 = vadd.f32 %v541, %v561
    %v572 = vadd.f32 %v544, %v561
    %v573 = vadd.f32 %v547, %v561
    %v574 = vadd.f32 %v550, %v561
    %v575 = vadd.f32 %v553, %v561
    %v576 = vadd.f32 %v556, %v561
    %v577 = vadd.f32 %v559, %v561
    %v594 = vlaneseq
    %v595 = vand.u32 %v594, 127
    %v596 = vlaneseq
    %v597 = vshrl.u32 %v596, 7
    %v598 = vsub.s32 %v595, %v597
    %v599 = vrot.slane %v562, %v598
    %v600 = vadd.s32 %v595, 4294967288
    %v601 = vlaneseq
    %v602 = vshrl.u32 %v601, 7
    %v603 = vsub.s32 %v600, %v602
    %v604 = vrot.slane %v563, %v603
    %vm605 = vcmask 130112
    %v606 = vsel %vm605, %v604, %v599
    %v607 = vadd.s32 %v595, 4294967280
    %v608 = vlaneseq
    %v609 = vshrl.u32 %v608, 7
    %v610 = vsub.s32 %v607, %v609
    %v611 = vrot.slane %v564, %v610
    %vm612 = vcmask 195712
    %v613 = vsel %vm612, %v611, %v606
    %v614 = vadd.s32 %v595, 4294967272
    %v615 = vlaneseq
    %v616 = vshrl.u32 %v615, 7
    %v617 = vsub.s32 %v614, %v616
    %v618 = vrot.slane %v565, %v617
    %vm619 = vcmask 261312
    %v620 = vsel %vm619, %v618, %v613
    %v621 = vadd.s32 %v595, 4294967264
    %v622 = vlaneseq
    %v623 = vshrl.u32 %v622, 7
    %v624 = vsub.s32 %v621, %v623
    %v625 = vrot.slane %v566, %v624
    %vm626 = vcmask 326912
    %v627 = vsel %vm626, %v625, %v620
    %v628 = vadd.s32 %v595, 4294967256
    %v629 = vlaneseq
    %v630 = vshrl.u32 %v629, 7
    %v631 = vsub.s32 %v628, %v630
    %v632 = vrot.slane %v567, %v631
    %vm633 = vcmask 392512
    %v634 = vsel %vm633, %v632, %v627
    %v635 = vadd.s32 %v595, 4294967248
    %v636 = vlaneseq
    %v637 = vshrl.u32 %v636, 7
    %v638 = vsub.s32 %v635, %v637
    %v639 = vrot.slane %v568, %v638
    %vm640 = vcmask 458112
    %v641 = vsel %vm640, %v639, %v634
    %v642 = vadd.s32 %v595, 4294967240
    %v643 = vlaneseq
    %v644 = vshrl.u32 %v643, 7
    %v645 = vsub.s32 %v642, %v644
    %v646 = vrot.slane %v569, %v645
    %vm647 = vcmask 523712
    %v648 = vsel %vm647, %v646, %v641
    %v649 = vadd.s32 %v595, 4294967232
    %v650 = vlaneseq
    %v651 = vshrl.u32 %v650, 7
    %v652 = vsub.s32 %v649, %v651
    %v653 = vrot.slane %v570, %v652
    %vm654 = vcmask 589312
    %v655 = vsel %vm654, %v653, %v648
    %v656 = vadd.s32 %v595, 4294967224
    %v657 = vlaneseq
    %v658 = vshrl.u32 %v657, 7
    %v659 = vsub.s32 %v656, %v658
    %v660 = vrot.slane %v571, %v659
    %vm661 = vcmask 654912
    %v662 = vsel %vm661, %v660, %v655
    %v663 = vadd.s32 %v595, 4294967216
    %v664 = vlaneseq
    %v665 = vshrl.u32 %v664, 7
    %v666 = vsub.s32 %v663, %v665
    %v667 = vrot.slane %v572, %v666
    %vm668 = vcmask 720512
    %v669 = vsel %vm668, %v667, %v662
    %v670 = vadd.s32 %v595, 4294967208
    %v671 = vlaneseq
    %v672 = vshrl.u32 %v671, 7
    %v673 = vsub.s32 %v670, %v672
    %v674 = vrot.slane %v573, %v673
    %vm675 = vcmask 786112
    %v676 = vsel %vm675, %v674, %v669
    %v677 = vadd.s32 %v595, 4294967200
    %v678 = vlaneseq
    %v679 = vshrl.u32 %v678, 7
    %v680 = vsub.s32 %v677, %v679
    %v681 = vrot.slane %v574, %v680
    %vm682 = vcmask 851712
    %v683 = vsel %vm682, %v681, %v676
    %v684 = vadd.s32 %v595, 4294967192
    %v685 = vlaneseq
    %v686 = vshrl.u32 %v685, 7
    %v687 = vsub.s32 %v684, %v686
    %v688 = vrot.slane %v575, %v687
    %vm689 = vcmask 917312
    %v690 = vsel %vm689, %v688, %v683
    %v691 = vadd.s32 %v595, 4294967184
    %v692 = vlaneseq
    %v693 = vshrl.u32 %v692, 7
    %v694 = vsub.s32 %v691, %v693
    %v695 = vrot.slane %v576, %v694
    %vm696 = vcmask 982912
    %v697 = vsel %vm696, %v695, %v690
    %v698 = vadd.s32 %v595, 4294967176
    %v699 = vlaneseq
    %v700 = vshrl.u32 %v699, 7
    %v701 = vsub.s32 %v698, %v700
    %v702 = vrot.slane %v577, %v701
    %vm703 = vcmask 1048512
    %v704 = vsel %vm703, %v702, %v697
    %706 = vst [vmem:[#allocation3] sm:$0x1] %v704
    // Predicated region
    $region30: #{tpu_custom_call.1} parent=1 // pred_check
      _
    $region31: #{tpu_custom_call.1} parent=1 // pred_check_branch
      %708 = sbr.rel (0) target = $region33
    $region32: #{tpu_custom_call.1} parent=1 // pred_region
      %s710 = ssub.s32 16, 16
      %711 = vsyncadd [#allocation4], %s710
      %s713 = sshll.u32 [#allocation3], 4
      %s714 = int_to_ptr.vmem [resolvable:$true] %s713
      %716 = dma.vmem_to_hbm [thread:$0]  %s714, 16, %s7, [#allocation4]
    $region33: #{tpu_custom_call.1} parent=1 // pred_fallthru
      _
    // Predicated region
    $region34: #{tpu_custom_call.1} parent=1 // pred_check
      _
    $region35: #{tpu_custom_call.1} parent=1 // pred_check_branch
      %718 = sbr.rel (0) target = $region37
    $region36: #{tpu_custom_call.1} parent=1 // pred_region
      %719 = dma.done [#allocation4], 16
    $region37: #{tpu_custom_call.1} parent=1 // pred_fallthru
      _
    %720 = vsyncpa [#allocation4], 1

</llo_original>
